<compile_context>
chip_gen: v6e
topology: v6e:2x2x1
jax: 0.10.0
libtpu: 0.0.40
codegen_flags: <defaults>
</compile_context>

<pallas_src>
import functools

import numpy as np
import jax
import jax.numpy as jnp
from jax.experimental import pallas as pl
from jax.experimental.pallas import tpu as pltpu


# ----------------------------------------------------------------------------
# Host-side (numpy) construction of the per-point upwind stencil coefficients.
# TODO(synk): the Order2_Diff1_Unstructure_(Perioid_)Upwind class sources are not
# in the spec; they are reconstructed as standard second-order non-uniform 3-point
# one-sided (upwind) first-derivative stencils selected by the wind sign.
# ----------------------------------------------------------------------------
def _stencil_backward(x, i):                 # points i-2, i-1, i  -> f'(x[i])
    h1 = x[i - 1] - x[i - 2]
    h2 = x[i] - x[i - 1]
    return (h2 / (h1 * (h1 + h2)),
            -(h1 + h2) / (h1 * h2),
            (h1 + 2.0 * h2) / (h2 * (h1 + h2)))


def _stencil_forward(x, i):                  # points i, i+1, i+2  -> f'(x[i])
    h1 = x[i + 1] - x[i]
    h2 = x[i + 2] - x[i + 1]
    return (-(2.0 * h1 + h2) / (h1 * (h1 + h2)),
            (h1 + h2) / (h1 * h2),
            -h1 / (h2 * (h1 + h2)))


def _stencil_central(x, i):                  # points i-1, i, i+1  -> f'(x[i])
    h1 = x[i] - x[i - 1]
    h2 = x[i + 1] - x[i]
    return (-h2 / (h1 * (h1 + h2)),
            (h2 - h1) / (h1 * h2),
            h1 / (h2 * (h1 + h2)))


def _upwind_coeffs_nonperiodic(x):
    """Backward-/forward-biased operators on a non-uniform, non-periodic axis.
    Returns (B, F), each (5, n) for stencil offsets (-2, -1, 0, +1, +2)."""
    x = np.asarray(x, np.float64)
    n = x.shape[0]
    B = np.zeros((5, n), np.float64)
    F = np.zeros((5, n), np.float64)
    for i in range(n):
        if i >= 2:
            cm2, cm1, c0 = _stencil_backward(x, i)
            B[0, i], B[1, i], B[2, i] = cm2, cm1, c0
        elif i == 1:
            cm1, c0, cp1 = _stencil_central(x, i)
            B[1, i], B[2, i], B[3, i] = cm1, c0, cp1
        else:                                           # i == 0
            c0, cp1, cp2 = _stencil_forward(x, i)
            B[2, i], B[3, i], B[4, i] = c0, cp1, cp2
        if i <= n - 3:
            c0, cp1, cp2 = _stencil_forward(x, i)
            F[2, i], F[3, i], F[4, i] = c0, cp1, cp2
        elif i == n - 2:
            cm1, c0, cp1 = _stencil_central(x, i)
            F[1, i], F[2, i], F[3, i] = cm1, c0, cp1
        else:                                           # i == n - 1
            cm2, cm1, c0 = _stencil_backward(x, i)
            F[0, i], F[1, i], F[2, i] = cm2, cm1, c0
    return B, F


def _upwind_coeffs_periodic(x, wrap_spacing=None):
    """Periodic variant.  Returns (B, F): B is (3, n) for offsets (-2, -1, 0),
    F is (3, n) for offsets (0, +1, +2); indices wrap around."""
    x = np.asarray(x, np.float64)
    n = x.shape[0]
    h = np.empty(n, np.float64)
    h[:-1] = np.diff(x)
    # TODO(synk): wrap spacing assumed equal to the first interval (uniform lon grid).
    h[-1] = float(wrap_spacing) if wrap_spacing is not None else (x[1] - x[0])
    B = np.zeros((3, n), np.float64)
    F = np.zeros((3, n), np.float64)
    for i in range(n):
        h1 = h[(i - 2) % n]
        h2 = h[(i - 1) % n]
        B[0, i] = h2 / (h1 * (h1 + h2))
        B[1, i] = -(h1 + h2) / (h1 * h2)
        B[2, i] = (h1 + 2.0 * h2) / (h2 * (h1 + h2))
        h1 = h[i]
        h2 = h[(i + 1) % n]
        F[0, i] = -(2.0 * h1 + h2) / (h1 * (h1 + h2))
        F[1, i] = (h1 + h2) / (h1 * h2)
        F[2, i] = -h1 / (h2 * (h1 + h2))
    return B, F


# ----------------------------------------------------------------------------
# Pallas kernel (lane-dense layout: rows = longitude, lanes = lat*lev flattened)
# ----------------------------------------------------------------------------
def _roll_lanes(a, shift):
    """Periodic shift along the lane axis.  Wrapped values are either genuinely
    periodic or multiplied by exactly-zero boundary coefficients.
    TODO(synk): swap to pltpu.roll once its rotate direction is verified in the
    MLIR dump on the target build; jnp.roll is guaranteed-correct here."""
    return jnp.roll(a, shift, axis=1)


def ctm3d_kernel(nz, flux_ref, c_ref, clo_ref, chi_ref, u_ref, v_ref, w_ref,
                 mf_ref, cx_ref, cy_ref, cz_ref, out_ref):
    tx = c_ref.shape[0]

    c = c_ref[...]                                   # (tx, ny*nz) current lon block
    acc = flux_ref[...]                              # accumulator = flux

    # ---- x (longitude, periodic; block rows).  One extended slab from the two
    #      2-row periodic halos, four shifted windows as static slices. -------
    ext = jnp.concatenate([clo_ref[0], c, chi_ref[0]], axis=0)   # (tx+4, nyz)
    cx = cx_ref[...]                                 # (tx, 6): [b-2,b-1,b0,f0,f+1,f+2]
    gbx = cx[:, 0:1] * ext[0:tx] + cx[:, 1:2] * ext[1:tx + 1] + cx[:, 2:3] * c
    gfx = cx[:, 3:4] * c + cx[:, 4:5] * ext[3:tx + 3] + cx[:, 5:6] * ext[4:tx + 4]
    u = jnp.clip(u_ref[...], -40.0, 40.0)
    acc = acc - u * mf_ref[...] * jnp.where(u >= 0.0, gbx, gfx)

    # ---- y (latitude, non-periodic; lane shifts by +-nz, +-2nz) -------------
    cy = cy_ref[...]                                 # (10, nyz): rows 0-4 bwd, 5-9 fwd
    ym2 = _roll_lanes(c, 2 * nz)
    ym1 = _roll_lanes(c, nz)
    yp1 = _roll_lanes(c, -nz)
    yp2 = _roll_lanes(c, -2 * nz)
    gby = (cy[0:1] * ym2 + cy[1:2] * ym1 + cy[2:3] * c
           + cy[3:4] * yp1 + cy[4:5] * yp2)
    gfy = (cy[5:6] * ym2 + cy[6:7] * ym1 + cy[7:8] * c
           + cy[8:9] * yp1 + cy[9:10] * yp2)
    v = jnp.clip(v_ref[...], -30.0, 30.0)
    acc = acc - v * jnp.where(v >= 0.0, gby, gfy)

    # ---- z (vertical, non-periodic; lane shifts by +-1, +-2), upwinded on -w.
    #      Top/bottom levels are pre-zeroed in cz (w_grad[...,0]=w_grad[...,-1]=0).
    cz = cz_ref[...]                                 # (10, nyz)
    zm2 = _roll_lanes(c, 2)
    zm1 = _roll_lanes(c, 1)
    zp1 = _roll_lanes(c, -1)
    zp2 = _roll_lanes(c, -2)
    gbz = (cz[0:1] * zm2 + cz[1:2] * zm1 + cz[2:3] * c
           + cz[3:4] * zp1 + cz[4:5] * zp2)
    gfz = (cz[5:6] * zm2 + cz[6:7] * zm1 + cz[7:8] * c
           + cz[8:9] * zp1 + cz[9:10] * zp2)
    w = jnp.clip(w_ref[...], -0.3, 0.3)
    acc = acc + w * jnp.where(-w >= 0.0, gbz, gfz)   # - (-w) * w_grad

    # dflux / du / dv / dw are exactly zero in the reference (0.0 * randn).
    zeros = jnp.zeros_like(acc)
    out_ref[0] = zeros        # dflux
    out_ref[1] = acc          # dconcent
    out_ref[2] = zeros        # du
    out_ref[3] = zeros        # dv
    out_ref[4] = zeros        # dw


# ----------------------------------------------------------------------------
# Module wrapper
# ----------------------------------------------------------------------------
class CTMModel3DPallas:
    """JAX/Pallas TPU port of CTM_Model_3D (upwind advection tendency)."""

    def __init__(self, grid_info, dim=3, tile_x=32, vmem_limit_bytes=64 * 1024 * 1024):
        vector_x, vector_y, vector_z, map_factor = grid_info
        self.dim = int(dim)
        # tile_x guidance: sweep 32-128 on v5e/v6e (128 MiB VMEM), keep <=32 on v7x.
        self.tile_x = int(tile_x)
        self.vmem_limit_bytes = int(vmem_limit_bytes)

        vector_x = np.asarray(vector_x, np.float64)
        vector_y = np.asarray(vector_y, np.float64)
        self.nx = vector_x.shape[0]
        self.ny = vector_y.shape[0]
        assert self.nx >= 3 and self.ny >= 3

        # Longitude (periodic) coefficients packed as (nx, 6).
        bx, fx = _upwind_coeffs_periodic(vector_x)
        self.cx_tab = np.stack([bx[0], bx[1], bx[2], fx[0], fx[1], fx[2]],
                               axis=1).astype(np.float32)

        # Latitude (non-periodic) coefficients packed as (10, ny).
        by, fy = _upwind_coeffs_nonperiodic(vector_y)
        self.cy_tab = np.concatenate([by, fy], axis=0).astype(np.float32)

        # Vertical coefficients packed as (10, nz); boundary levels zeroed,
        # which implements w_grad[..., 0] = w_grad[..., -1] = 0 of the reference.
        if self.dim == 3:
            vector_z = np.asarray(vector_z, np.float64)
            self.nz = vector_z.shape[0]
            assert self.nz >= 3
            bz, fz = _upwind_coeffs_nonperiodic(vector_z)
            bz[:, 0] = 0.0; bz[:, -1] = 0.0
            fz[:, 0] = 0.0; fz[:, -1] = 0.0
            self.cz_tab = np.concatenate([bz, fz], axis=0).astype(np.float32)
        else:
            self.nz = None
            self.cz_tab = None      # dim == 2: vertical term vanishes

        # TODO(synk): the original module's map_factor shape is unspecified; a
        # per-latitude (ny,) profile (1/cos(lat)) is assumed.
        mf = np.asarray(map_factor, np.float32).reshape(-1)
        assert mf.shape[0] == self.ny, "map_factor must be a (ny,) latitude profile"
        self.mf_y = mf

        self._jit_forward = jax.jit(self._forward)

    # ------------------------------------------------------------------
    def _pick_tile(self, nx):
        """Largest multiple-of-8 divisor of nx <= tile_x, preferring >= 2 grid
        steps so both v7x TensorCores get work."""
        cands = [d for d in range(8, min(self.tile_x, nx) + 1, 8) if nx % d == 0]
        multi = [d for d in cands if nx // d >= 2]
        if multi:
            return max(multi)
        if cands:
            return max(cands)
        return nx   # TODO(synk): pad nx for >=2 parallel grid steps on v7x.

    # ------------------------------------------------------------------
    def _forward(self, flux, concent, u, v, w):
        nx, ny, nz = concent.shape
        assert nx == self.nx and ny == self.ny
        nyz = ny * nz

        if self.dim == 3:
            assert nz == self.nz
            cz_tab = self.cz_tab
        else:
            cz_tab = np.zeros((10, nz), np.float32)

        tx = self._pick_tile(nx)
        nb = nx // tx

        # Lane-dense layout: (nx, ny, nz) -> (nx, ny*nz).  Reshape is free.
        f2, c2, u2, v2, w2 = (a.reshape(nx, nyz) for a in (flux, concent, u, v, w))

        # 2-row periodic longitude halos per block (tiny wrapper-side gather).
        lo = jnp.stack([c2[(i * tx - 2) % nx:((i * tx - 2) % nx) + 2]
                        for i in range(nb)], axis=0)          # (nb, 2, nyz)
        hi = jnp.stack([c2[(i * tx + tx) % nx:((i * tx + tx) % nx) + 2]
                        for i in range(nb)], axis=0)          # (nb, 2, nyz)

        # Lane-flattened constants (coefficients / map factor).
        cx = jnp.asarray(self.cx_tab)                                   # (nx, 6)
        cyL = jnp.asarray(np.repeat(self.cy_tab, nz, axis=1))           # (10, nyz)
        czL = jnp.asarray(np.tile(cz_tab, (1, ny)))                     # (10, nyz)
        mfL = jnp.asarray(np.repeat(self.mf_y, nz)[None, :])            # (1, nyz)

        field_spec = pl.BlockSpec((tx, nyz), lambda i: (i, 0))
        halo_spec = pl.BlockSpec((1, 2, nyz), lambda i: (i, 0, 0))
        mf_spec = pl.BlockSpec((1, nyz), lambda i: (0, 0))
        cx_spec = pl.BlockSpec((tx, 6), lambda i: (i, 0))
        cyz_spec = pl.BlockSpec((10, nyz), lambda i: (0, 0))

        out = pl.pallas_call(
            functools.partial(ctm3d_kernel, nz),
            out_shape=jax.ShapeDtypeStruct((5, nx, nyz), jnp.float32),
            grid=(nb,),
            in_specs=[field_spec,        # flux
                      field_spec,        # concent (current block)
                      halo_spec,         # left periodic x-halo (2 rows)
                      halo_spec,         # right periodic x-halo (2 rows)
                      field_spec,        # u
                      field_spec,        # v
                      field_spec,        # w
                      mf_spec, cx_spec, cyz_spec, cyz_spec],
            out_specs=pl.BlockSpec((5, tx, nyz), lambda i: (0, i, 0)),
            compiler_params=pltpu.CompilerParams(
                dimension_semantics=("parallel",),
                vmem_limit_bytes=self.vmem_limit_bytes),
        )(f2, c2, lo, hi, u2, v2, w2, mfL, cx, cyL, czL)

        return out.reshape(5, nx, ny, nz)

    # ------------------------------------------------------------------
    def __call__(self, t, state):
        del t
        flux, concent, u, v, w = state
        args = [jnp.asarray(a, jnp.float32) for a in (flux, concent, u, v, w)]
        return self._jit_forward(*args)


# ----------------------------------------------------------------------------
# Pure-JAX (non-Pallas) reference for a correctness check (original layout).
# ----------------------------------------------------------------------------
def reference_forward(model, state):
    flux, concent, u, v, w = (jnp.asarray(a, jnp.float32) for a in state)
    u = jnp.clip(u, -40.0, 40.0)
    v = jnp.clip(v, -30.0, 30.0)
    w = jnp.clip(w, -0.3, 0.3)
    c = concent
    nz = c.shape[2]

    def sh(off, axis):
        return jnp.roll(c, -off, axis=axis)

    cx = jnp.asarray(model.cx_tab)                                    # (nx, 6)
    gbx = (cx[:, 0][:, None, None] * sh(-2, 0) + cx[:, 1][:, None, None] * sh(-1, 0)
           + cx[:, 2][:, None, None] * c)
    gfx = (cx[:, 3][:, None, None] * c + cx[:, 4][:, None, None] * sh(1, 0)
           + cx[:, 5][:, None, None] * sh(2, 0))
    grad_x = jnp.where(u >= 0.0, gbx, gfx)

    cy = jnp.asarray(model.cy_tab)                                    # (10, ny)
    gby = (cy[0][None, :, None] * sh(-2, 1) + cy[1][None, :, None] * sh(-1, 1)
           + cy[2][None, :, None] * c + cy[3][None, :, None] * sh(1, 1)
           + cy[4][None, :, None] * sh(2, 1))
    gfy = (cy[5][None, :, None] * sh(-2, 1) + cy[6][None, :, None] * sh(-1, 1)
           + cy[7][None, :, None] * c + cy[8][None, :, None] * sh(1, 1)
           + cy[9][None, :, None] * sh(2, 1))
    grad_y = jnp.where(v >= 0.0, gby, gfy)

    cz_tab = model.cz_tab if model.cz_tab is not None else np.zeros((10, nz), np.float32)
    cz = jnp.asarray(cz_tab)                                          # (10, nz)
    gbz = (cz[0][None, None, :] * sh(-2, 2) + cz[1][None, None, :] * sh(-1, 2)
           + cz[2][None, None, :] * c + cz[3][None, None, :] * sh(1, 2)
           + cz[4][None, None, :] * sh(2, 2))
    gfz = (cz[5][None, None, :] * sh(-2, 2) + cz[6][None, None, :] * sh(-1, 2)
           + cz[7][None, None, :] * c + cz[8][None, None, :] * sh(1, 2)
           + cz[9][None, None, :] * sh(2, 2))
    w_grad = jnp.where(-w >= 0.0, gbz, gfz)

    dconc = (flux - u * jnp.asarray(model.mf_y)[None, :, None] * grad_x
             - v * grad_y + w * w_grad)
    z = jnp.zeros_like(dconc)
    return jnp.stack([z, dconc, z, z, z], axis=0)


# ----------------------------------------------------------------------------
if __name__ == "__main__":
    nx, ny, nz = 32, 16, 8   # (lon, lat, lev); ny*nz = 128 -> fully lane-dense

    # deterministic grid_info: periodic lon, non-uniform lat, non-uniform vertical
    vector_x = np.linspace(0.0, 360.0, nx, endpoint=False)
    vector_y = -60.0 + 120.0 * (np.arange(ny) / (ny - 1)) ** 1.1
    vector_z = np.linspace(0.1, 1.0, nz) ** 1.2
    map_factor = (1.0 / np.cos(np.deg2rad(vector_y))).astype(np.float32)

    model = CTMModel3DPallas((vector_x, vector_y, vector_z, map_factor),
                             dim=3, tile_x=32)

    key = jax.random.PRNGKey(0)
    kf, kc, ku, kv, kw = jax.random.split(key, 5)
    shape = (nx, ny, nz)
    flux = jax.random.normal(kf, shape, jnp.float32)
    concent = jax.random.normal(kc, shape, jnp.float32)
    u = 50.0 * jax.random.normal(ku, shape, jnp.float32)  # exercises clipping + both branches
    v = 40.0 * jax.random.normal(kv, shape, jnp.float32)
    w = 0.5 * jax.random.normal(kw, shape, jnp.float32)
    state = jnp.stack([flux, concent, u, v, w], axis=0)

    result = jax.block_until_ready(model(0.0, state))
    assert result.shape == (5, nx, ny, nz)

    ref = jax.block_until_ready(reference_forward(model, state))
    np.testing.assert_allclose(np.asarray(result), np.asarray(ref),
                               rtol=1e-5, atol=1e-4)
    print("KERNEL_OK")
</pallas_src>

<mosaic_0001>
module attributes {stable_mosaic.version = 11 : i64} {
  func.func @ctm3d_kernel(%arg0: i32, %arg1: memref<16x128xf32, #tpu.memory_space<vmem>>, %arg2: memref<16x128xf32, #tpu.memory_space<vmem>>, %arg3: memref<1x2x128xf32, #tpu.memory_space<vmem>>, %arg4: memref<1x2x128xf32, #tpu.memory_space<vmem>>, %arg5: memref<16x128xf32, #tpu.memory_space<vmem>>, %arg6: memref<16x128xf32, #tpu.memory_space<vmem>>, %arg7: memref<16x128xf32, #tpu.memory_space<vmem>>, %arg8: memref<1x128xf32, #tpu.memory_space<vmem>>, %arg9: memref<16x6xf32, #tpu.memory_space<vmem>>, %arg10: memref<10x128xf32, #tpu.memory_space<vmem>>, %arg11: memref<10x128xf32, #tpu.memory_space<vmem>>, %arg12: memref<5x16x128xf32, #tpu.memory_space<vmem>>) attributes {dimension_semantics = [#tpu.dimension_semantics<parallel>], iteration_bounds = array<i64: 2>, scalar_prefetch = 0 : i64, scratch_operands = 0 : i64, tpu.core_type = #tpu.core_type<tc>, window_params = [{transform_indices = @transform_0, window_bounds = array<i64: 16, 128>}, {transform_indices = @transform_1, window_bounds = array<i64: 16, 128>}, {transform_indices = @transform_2, window_bounds = array<i64: 1, 2, 128>}, {transform_indices = @transform_3, window_bounds = array<i64: 1, 2, 128>}, {transform_indices = @transform_4, window_bounds = array<i64: 16, 128>}, {transform_indices = @transform_5, window_bounds = array<i64: 16, 128>}, {transform_indices = @transform_6, window_bounds = array<i64: 16, 128>}, {pipeline_mode = #tpu.pipeline_mode<synchronous>, transform_indices = @transform_7, window_bounds = array<i64: 1, 128>}, {transform_indices = @transform_8, window_bounds = array<i64: 16, 6>}, {pipeline_mode = #tpu.pipeline_mode<synchronous>, transform_indices = @transform_9, window_bounds = array<i64: 10, 128>}, {pipeline_mode = #tpu.pipeline_mode<synchronous>, transform_indices = @transform_10, window_bounds = array<i64: 10, 128>}, {transform_indices = @transform_11, window_bounds = array<i64: 5, 16, 128>}]} {
    %c0 = arith.constant 0 : index
    %c0_0 = arith.constant 0 : index
    %0 = vector.load %arg2[%c0, %c0_0] : memref<16x128xf32, #tpu.memory_space<vmem>>, vector<16x128xf32>
    %c0_1 = arith.constant 0 : index
    %c0_2 = arith.constant 0 : index
    %1 = vector.load %arg1[%c0_1, %c0_2] : memref<16x128xf32, #tpu.memory_space<vmem>>, vector<16x128xf32>
    %c0_3 = arith.constant 0 : index
    %c0_4 = arith.constant 0 : index
    %c0_5 = arith.constant 0 : index
    %2 = vector.load %arg3[%c0_3, %c0_4, %c0_5] : memref<1x2x128xf32, #tpu.memory_space<vmem>>, vector<1x2x128xf32>
    %3 = vector.shape_cast %2 : vector<1x2x128xf32> to vector<2x128xf32>
    %c0_6 = arith.constant 0 : index
    %c0_7 = arith.constant 0 : index
    %c0_8 = arith.constant 0 : index
    %4 = vector.load %arg4[%c0_6, %c0_7, %c0_8] : memref<1x2x128xf32, #tpu.memory_space<vmem>>, vector<1x2x128xf32>
    %5 = vector.shape_cast %4 : vector<1x2x128xf32> to vector<2x128xf32>
    %6 = tpu.concatenate %3, %0, %5 in 0 : vector<2x128xf32>, vector<16x128xf32>, vector<2x128xf32> -> vector<20x128xf32>
    %c0_9 = arith.constant 0 : index
    %c0_10 = arith.constant 0 : index
    %7 = vector.load %arg9[%c0_9, %c0_10] : memref<16x6xf32, #tpu.memory_space<vmem>>, vector<16x6xf32>
    %8 = vector.extract_strided_slice %7 {offsets = [0, 0], sizes = [16, 1], strides = [1, 1]} : vector<16x6xf32> to vector<16x1xf32>
    %9 = vector.extract_strided_slice %6 {offsets = [0, 0], sizes = [16, 128], strides = [1, 1]} : vector<20x128xf32> to vector<16x128xf32>
    %10 = vector.broadcast %8 : vector<16x1xf32> to vector<16x128xf32>
    %11 = arith.mulf %10, %9 : vector<16x128xf32>
    %12 = vector.extract_strided_slice %7 {offsets = [0, 1], sizes = [16, 1], strides = [1, 1]} : vector<16x6xf32> to vector<16x1xf32>
    %13 = vector.extract_strided_slice %6 {offsets = [1, 0], sizes = [16, 128], strides = [1, 1]} : vector<20x128xf32> to vector<16x128xf32>
    %14 = vector.broadcast %12 : vector<16x1xf32> to vector<16x128xf32>
    %15 = arith.mulf %14, %13 : vector<16x128xf32>
    %16 = arith.addf %11, %15 : vector<16x128xf32>
    %17 = vector.extract_strided_slice %7 {offsets = [0, 2], sizes = [16, 1], strides = [1, 1]} : vector<16x6xf32> to vector<16x1xf32>
    %18 = vector.broadcast %17 : vector<16x1xf32> to vector<16x128xf32>
    %19 = arith.mulf %18, %0 : vector<16x128xf32>
    %20 = arith.addf %16, %19 : vector<16x128xf32>
    %21 = vector.extract_strided_slice %7 {offsets = [0, 3], sizes = [16, 1], strides = [1, 1]} : vector<16x6xf32> to vector<16x1xf32>
    %22 = vector.broadcast %21 : vector<16x1xf32> to vector<16x128xf32>
    %23 = arith.mulf %22, %0 : vector<16x128xf32>
    %24 = vector.extract_strided_slice %7 {offsets = [0, 4], sizes = [16, 1], strides = [1, 1]} : vector<16x6xf32> to vector<16x1xf32>
    %25 = vector.extract_strided_slice %6 {offsets = [3, 0], sizes = [16, 128], strides = [1, 1]} : vector<20x128xf32> to vector<16x128xf32>
    %26 = vector.broadcast %24 : vector<16x1xf32> to vector<16x128xf32>
    %27 = arith.mulf %26, %25 : vector<16x128xf32>
    %28 = arith.addf %23, %27 : vector<16x128xf32>
    %29 = vector.extract_strided_slice %7 {offsets = [0, 5], sizes = [16, 1], strides = [1, 1]} : vector<16x6xf32> to vector<16x1xf32>
    %30 = vector.extract_strided_slice %6 {offsets = [4, 0], sizes = [16, 128], strides = [1, 1]} : vector<20x128xf32> to vector<16x128xf32>
    %31 = vector.broadcast %29 : vector<16x1xf32> to vector<16x128xf32>
    %32 = arith.mulf %31, %30 : vector<16x128xf32>
    %33 = arith.addf %28, %32 : vector<16x128xf32>
    %c0_11 = arith.constant 0 : index
    %c0_12 = arith.constant 0 : index
    %34 = vector.load %arg5[%c0_11, %c0_12] : memref<16x128xf32, #tpu.memory_space<vmem>>, vector<16x128xf32>
    %cst = arith.constant -4.000000e+01 : f32
    %cst_13 = arith.constant 4.000000e+01 : f32
    %35 = vector.broadcast %cst : f32 to vector<16x128xf32>
    %36 = arith.maximumf %35, %34 : vector<16x128xf32>
    %37 = vector.broadcast %cst_13 : f32 to vector<16x128xf32>
    %38 = arith.minimumf %37, %36 : vector<16x128xf32>
    %c0_14 = arith.constant 0 : index
    %c0_15 = arith.constant 0 : index
    %39 = vector.load %arg8[%c0_14, %c0_15] : memref<1x128xf32, #tpu.memory_space<vmem>>, vector<1x128xf32>
    %40 = vector.broadcast %39 : vector<1x128xf32> to vector<16x128xf32>
    %41 = arith.mulf %38, %40 : vector<16x128xf32>
    %cst_16 = arith.constant 0.000000e+00 : f32
    %42 = vector.broadcast %cst_16 : f32 to vector<16x128xf32>
    %43 = arith.cmpf oge, %38, %42 : vector<16x128xf32>
    %44 = arith.select %43, %20, %33 : vector<16x128xi1>, vector<16x128xf32>
    %45 = arith.mulf %41, %44 : vector<16x128xf32>
    %46 = arith.subf %1, %45 : vector<16x128xf32>
    %c0_17 = arith.constant 0 : index
    %c0_18 = arith.constant 0 : index
    %47 = vector.load %arg10[%c0_17, %c0_18] : memref<10x128xf32, #tpu.memory_space<vmem>>, vector<10x128xf32>
    %48 = vector.extract_strided_slice %0 {offsets = [0, 112], sizes = [16, 16], strides = [1, 1]} : vector<16x128xf32> to vector<16x16xf32>
    %49 = vector.extract_strided_slice %0 {offsets = [0, 0], sizes = [16, 112], strides = [1, 1]} : vector<16x128xf32> to vector<16x112xf32>
    %50 = tpu.concatenate %48, %49 in 1 : vector<16x16xf32>, vector<16x112xf32> -> vector<16x128xf32>
    %51 = vector.extract_strided_slice %0 {offsets = [0, 120], sizes = [16, 8], strides = [1, 1]} : vector<16x128xf32> to vector<16x8xf32>
    %52 = vector.extract_strided_slice %0 {offsets = [0, 0], sizes = [16, 120], strides = [1, 1]} : vector<16x128xf32> to vector<16x120xf32>
    %53 = tpu.concatenate %51, %52 in 1 : vector<16x8xf32>, vector<16x120xf32> -> vector<16x128xf32>
    %54 = vector.extract_strided_slice %0 {offsets = [0, 8], sizes = [16, 120], strides = [1, 1]} : vector<16x128xf32> to vector<16x120xf32>
    %55 = vector.extract_strided_slice %0 {offsets = [0, 0], sizes = [16, 8], strides = [1, 1]} : vector<16x128xf32> to vector<16x8xf32>
    %56 = tpu.concatenate %54, %55 in 1 : vector<16x120xf32>, vector<16x8xf32> -> vector<16x128xf32>
    %57 = vector.extract_strided_slice %0 {offsets = [0, 16], sizes = [16, 112], strides = [1, 1]} : vector<16x128xf32> to vector<16x112xf32>
    %58 = vector.extract_strided_slice %0 {offsets = [0, 0], sizes = [16, 16], strides = [1, 1]} : vector<16x128xf32> to vector<16x16xf32>
    %59 = tpu.concatenate %57, %58 in 1 : vector<16x112xf32>, vector<16x16xf32> -> vector<16x128xf32>
    %60 = vector.extract_strided_slice %47 {offsets = [0, 0], sizes = [1, 128], strides = [1, 1]} : vector<10x128xf32> to vector<1x128xf32>
    %61 = vector.broadcast %60 : vector<1x128xf32> to vector<16x128xf32>
    %62 = arith.mulf %61, %50 : vector<16x128xf32>
    %63 = vector.extract_strided_slice %47 {offsets = [1, 0], sizes = [1, 128], strides = [1, 1]} : vector<10x128xf32> to vector<1x128xf32>
    %64 = vector.broadcast %63 : vector<1x128xf32> to vector<16x128xf32>
    %65 = arith.mulf %64, %53 : vector<16x128xf32>
    %66 = arith.addf %62, %65 : vector<16x128xf32>
    %67 = vector.extract_strided_slice %47 {offsets = [2, 0], sizes = [1, 128], strides = [1, 1]} : vector<10x128xf32> to vector<1x128xf32>
    %68 = vector.broadcast %67 : vector<1x128xf32> to vector<16x128xf32>
    %69 = arith.mulf %68, %0 : vector<16x128xf32>
    %70 = arith.addf %66, %69 : vector<16x128xf32>
    %71 = vector.extract_strided_slice %47 {offsets = [3, 0], sizes = [1, 128], strides = [1, 1]} : vector<10x128xf32> to vector<1x128xf32>
    %72 = vector.broadcast %71 : vector<1x128xf32> to vector<16x128xf32>
    %73 = arith.mulf %72, %56 : vector<16x128xf32>
    %74 = arith.addf %70, %73 : vector<16x128xf32>
    %75 = vector.extract_strided_slice %47 {offsets = [4, 0], sizes = [1, 128], strides = [1, 1]} : vector<10x128xf32> to vector<1x128xf32>
    %76 = vector.broadcast %75 : vector<1x128xf32> to vector<16x128xf32>
    %77 = arith.mulf %76, %59 : vector<16x128xf32>
    %78 = arith.addf %74, %77 : vector<16x128xf32>
    %79 = vector.extract_strided_slice %47 {offsets = [5, 0], sizes = [1, 128], strides = [1, 1]} : vector<10x128xf32> to vector<1x128xf32>
    %80 = vector.broadcast %79 : vector<1x128xf32> to vector<16x128xf32>
    %81 = arith.mulf %80, %50 : vector<16x128xf32>
    %82 = vector.extract_strided_slice %47 {offsets = [6, 0], sizes = [1, 128], strides = [1, 1]} : vector<10x128xf32> to vector<1x128xf32>
    %83 = vector.broadcast %82 : vector<1x128xf32> to vector<16x128xf32>
    %84 = arith.mulf %83, %53 : vector<16x128xf32>
    %85 = arith.addf %81, %84 : vector<16x128xf32>
    %86 = vector.extract_strided_slice %47 {offsets = [7, 0], sizes = [1, 128], strides = [1, 1]} : vector<10x128xf32> to vector<1x128xf32>
    %87 = vector.broadcast %86 : vector<1x128xf32> to vector<16x128xf32>
    %88 = arith.mulf %87, %0 : vector<16x128xf32>
    %89 = arith.addf %85, %88 : vector<16x128xf32>
    %90 = vector.extract_strided_slice %47 {offsets = [8, 0], sizes = [1, 128], strides = [1, 1]} : vector<10x128xf32> to vector<1x128xf32>
    %91 = vector.broadcast %90 : vector<1x128xf32> to vector<16x128xf32>
    %92 = arith.mulf %91, %56 : vector<16x128xf32>
    %93 = arith.addf %89, %92 : vector<16x128xf32>
    %94 = vector.extract_strided_slice %47 {offsets = [9, 0], sizes = [1, 128], strides = [1, 1]} : vector<10x128xf32> to vector<1x128xf32>
    %95 = vector.broadcast %94 : vector<1x128xf32> to vector<16x128xf32>
    %96 = arith.mulf %95, %59 : vector<16x128xf32>
    %97 = arith.addf %93, %96 : vector<16x128xf32>
    %c0_19 = arith.constant 0 : index
    %c0_20 = arith.constant 0 : index
    %98 = vector.load %arg6[%c0_19, %c0_20] : memref<16x128xf32, #tpu.memory_space<vmem>>, vector<16x128xf32>
    %cst_21 = arith.constant -3.000000e+01 : f32
    %cst_22 = arith.constant 3.000000e+01 : f32
    %99 = vector.broadcast %cst_21 : f32 to vector<16x128xf32>
    %100 = arith.maximumf %99, %98 : vector<16x128xf32>
    %101 = vector.broadcast %cst_22 : f32 to vector<16x128xf32>
    %102 = arith.minimumf %101, %100 : vector<16x128xf32>
    %cst_23 = arith.constant 0.000000e+00 : f32
    %103 = vector.broadcast %cst_23 : f32 to vector<16x128xf32>
    %104 = arith.cmpf oge, %102, %103 : vector<16x128xf32>
    %105 = arith.select %104, %78, %97 : vector<16x128xi1>, vector<16x128xf32>
    %106 = arith.mulf %102, %105 : vector<16x128xf32>
    %107 = arith.subf %46, %106 : vector<16x128xf32>
    %c0_24 = arith.constant 0 : index
    %c0_25 = arith.constant 0 : index
    %108 = vector.load %arg11[%c0_24, %c0_25] : memref<10x128xf32, #tpu.memory_space<vmem>>, vector<10x128xf32>
    %109 = vector.extract_strided_slice %0 {offsets = [0, 126], sizes = [16, 2], strides = [1, 1]} : vector<16x128xf32> to vector<16x2xf32>
    %110 = vector.extract_strided_slice %0 {offsets = [0, 0], sizes = [16, 126], strides = [1, 1]} : vector<16x128xf32> to vector<16x126xf32>
    %111 = tpu.concatenate %109, %110 in 1 : vector<16x2xf32>, vector<16x126xf32> -> vector<16x128xf32>
    %112 = vector.extract_strided_slice %0 {offsets = [0, 127], sizes = [16, 1], strides = [1, 1]} : vector<16x128xf32> to vector<16x1xf32>
    %113 = vector.extract_strided_slice %0 {offsets = [0, 0], sizes = [16, 127], strides = [1, 1]} : vector<16x128xf32> to vector<16x127xf32>
    %114 = tpu.concatenate %112, %113 in 1 : vector<16x1xf32>, vector<16x127xf32> -> vector<16x128xf32>
    %115 = vector.extract_strided_slice %0 {offsets = [0, 1], sizes = [16, 127], strides = [1, 1]} : vector<16x128xf32> to vector<16x127xf32>
    %116 = vector.extract_strided_slice %0 {offsets = [0, 0], sizes = [16, 1], strides = [1, 1]} : vector<16x128xf32> to vector<16x1xf32>
    %117 = tpu.concatenate %115, %116 in 1 : vector<16x127xf32>, vector<16x1xf32> -> vector<16x128xf32>
    %118 = vector.extract_strided_slice %0 {offsets = [0, 2], sizes = [16, 126], strides = [1, 1]} : vector<16x128xf32> to vector<16x126xf32>
    %119 = vector.extract_strided_slice %0 {offsets = [0, 0], sizes = [16, 2], strides = [1, 1]} : vector<16x128xf32> to vector<16x2xf32>
    %120 = tpu.concatenate %118, %119 in 1 : vector<16x126xf32>, vector<16x2xf32> -> vector<16x128xf32>
    %121 = vector.extract_strided_slice %108 {offsets = [0, 0], sizes = [1, 128], strides = [1, 1]} : vector<10x128xf32> to vector<1x128xf32>
    %122 = vector.broadcast %121 : vector<1x128xf32> to vector<16x128xf32>
    %123 = arith.mulf %122, %111 : vector<16x128xf32>
    %124 = vector.extract_strided_slice %108 {offsets = [1, 0], sizes = [1, 128], strides = [1, 1]} : vector<10x128xf32> to vector<1x128xf32>
    %125 = vector.broadcast %124 : vector<1x128xf32> to vector<16x128xf32>
    %126 = arith.mulf %125, %114 : vector<16x128xf32>
    %127 = arith.addf %123, %126 : vector<16x128xf32>
    %128 = vector.extract_strided_slice %108 {offsets = [2, 0], sizes = [1, 128], strides = [1, 1]} : vector<10x128xf32> to vector<1x128xf32>
    %129 = vector.broadcast %128 : vector<1x128xf32> to vector<16x128xf32>
    %130 = arith.mulf %129, %0 : vector<16x128xf32>
    %131 = arith.addf %127, %130 : vector<16x128xf32>
    %132 = vector.extract_strided_slice %108 {offsets = [3, 0], sizes = [1, 128], strides = [1, 1]} : vector<10x128xf32> to vector<1x128xf32>
    %133 = vector.broadcast %132 : vector<1x128xf32> to vector<16x128xf32>
    %134 = arith.mulf %133, %117 : vector<16x128xf32>
    %135 = arith.addf %131, %134 : vector<16x128xf32>
    %136 = vector.extract_strided_slice %108 {offsets = [4, 0], sizes = [1, 128], strides = [1, 1]} : vector<10x128xf32> to vector<1x128xf32>
    %137 = vector.broadcast %136 : vector<1x128xf32> to vector<16x128xf32>
    %138 = arith.mulf %137, %120 : vector<16x128xf32>
    %139 = arith.addf %135, %138 : vector<16x128xf32>
    %140 = vector.extract_strided_slice %108 {offsets = [5, 0], sizes = [1, 128], strides = [1, 1]} : vector<10x128xf32> to vector<1x128xf32>
    %141 = vector.broadcast %140 : vector<1x128xf32> to vector<16x128xf32>
    %142 = arith.mulf %141, %111 : vector<16x128xf32>
    %143 = vector.extract_strided_slice %108 {offsets = [6, 0], sizes = [1, 128], strides = [1, 1]} : vector<10x128xf32> to vector<1x128xf32>
    %144 = vector.broadcast %143 : vector<1x128xf32> to vector<16x128xf32>
    %145 = arith.mulf %144, %114 : vector<16x128xf32>
    %146 = arith.addf %142, %145 : vector<16x128xf32>
    %147 = vector.extract_strided_slice %108 {offsets = [7, 0], sizes = [1, 128], strides = [1, 1]} : vector<10x128xf32> to vector<1x128xf32>
    %148 = vector.broadcast %147 : vector<1x128xf32> to vector<16x128xf32>
    %149 = arith.mulf %148, %0 : vector<16x128xf32>
    %150 = arith.addf %146, %149 : vector<16x128xf32>
    %151 = vector.extract_strided_slice %108 {offsets = [8, 0], sizes = [1, 128], strides = [1, 1]} : vector<10x128xf32> to vector<1x128xf32>
    %152 = vector.broadcast %151 : vector<1x128xf32> to vector<16x128xf32>
    %153 = arith.mulf %152, %117 : vector<16x128xf32>
    %154 = arith.addf %150, %153 : vector<16x128xf32>
    %155 = vector.extract_strided_slice %108 {offsets = [9, 0], sizes = [1, 128], strides = [1, 1]} : vector<10x128xf32> to vector<1x128xf32>
    %156 = vector.broadcast %155 : vector<1x128xf32> to vector<16x128xf32>
    %157 = arith.mulf %156, %120 : vector<16x128xf32>
    %158 = arith.addf %154, %157 : vector<16x128xf32>
    %c0_26 = arith.constant 0 : index
    %c0_27 = arith.constant 0 : index
    %159 = vector.load %arg7[%c0_26, %c0_27] : memref<16x128xf32, #tpu.memory_space<vmem>>, vector<16x128xf32>
    %cst_28 = arith.constant -3.000000e-01 : f32
    %cst_29 = arith.constant 3.000000e-01 : f32
    %160 = vector.broadcast %cst_28 : f32 to vector<16x128xf32>
    %161 = arith.maximumf %160, %159 : vector<16x128xf32>
    %162 = vector.broadcast %cst_29 : f32 to vector<16x128xf32>
    %163 = arith.minimumf %162, %161 : vector<16x128xf32>
    %cst_30 = arith.constant 0.000000e+00 : f32
    %164 = vector.broadcast %cst_30 : f32 to vector<16x128xf32>
    %165 = arith.subf %164, %163 : vector<16x128xf32>
    %cst_31 = arith.constant 0.000000e+00 : f32
    %166 = vector.broadcast %cst_31 : f32 to vector<16x128xf32>
    %167 = arith.cmpf oge, %165, %166 : vector<16x128xf32>
    %168 = arith.select %167, %139, %158 : vector<16x128xi1>, vector<16x128xf32>
    %169 = arith.mulf %163, %168 : vector<16x128xf32>
    %170 = arith.addf %107, %169 : vector<16x128xf32>
    %cst_32 = arith.constant 0.000000e+00 : f32
    %171 = vector.broadcast %cst_32 : f32 to vector<16x128xf32>
    %c0_33 = arith.constant 0 : index
    %c0_34 = arith.constant 0 : index
    %c0_35 = arith.constant 0 : index
    %172 = vector.load %arg12[%c0_33, %c0_34, %c0_35] : memref<5x16x128xf32, #tpu.memory_space<vmem>>, vector<1x16x128xf32>
    %173 = vector.shape_cast %172 : vector<1x16x128xf32> to vector<16x128xf32>
    %174 = vector.shape_cast %171 : vector<16x128xf32> to vector<1x16x128xf32>
    tpu.vector_store %arg12[%c0_33, %c0_34, %c0_35], %174 {strides = array<i32>} : memref<5x16x128xf32, #tpu.memory_space<vmem>>, vector<1x16x128xf32>,
    %c1 = arith.constant 1 : index
    %c0_36 = arith.constant 0 : index
    %c0_37 = arith.constant 0 : index
    %175 = vector.load %arg12[%c1, %c0_36, %c0_37] : memref<5x16x128xf32, #tpu.memory_space<vmem>>, vector<1x16x128xf32>
    %176 = vector.shape_cast %175 : vector<1x16x128xf32> to vector<16x128xf32>
    %177 = vector.shape_cast %170 : vector<16x128xf32> to vector<1x16x128xf32>
    tpu.vector_store %arg12[%c1, %c0_36, %c0_37], %177 {strides = array<i32>} : memref<5x16x128xf32, #tpu.memory_space<vmem>>, vector<1x16x128xf32>,
    %c2 = arith.constant 2 : index
    %c0_38 = arith.constant 0 : index
    %c0_39 = arith.constant 0 : index
    %178 = vector.load %arg12[%c2, %c0_38, %c0_39] : memref<5x16x128xf32, #tpu.memory_space<vmem>>, vector<1x16x128xf32>
    %179 = vector.shape_cast %178 : vector<1x16x128xf32> to vector<16x128xf32>
    %180 = vector.shape_cast %171 : vector<16x128xf32> to vector<1x16x128xf32>
    tpu.vector_store %arg12[%c2, %c0_38, %c0_39], %180 {strides = array<i32>} : memref<5x16x128xf32, #tpu.memory_space<vmem>>, vector<1x16x128xf32>,
    %c3 = arith.constant 3 : index
    %c0_40 = arith.constant 0 : index
    %c0_41 = arith.constant 0 : index
    %181 = vector.load %arg12[%c3, %c0_40, %c0_41] : memref<5x16x128xf32, #tpu.memory_space<vmem>>, vector<1x16x128xf32>
    %182 = vector.shape_cast %181 : vector<1x16x128xf32> to vector<16x128xf32>
    %183 = vector.shape_cast %171 : vector<16x128xf32> to vector<1x16x128xf32>
    tpu.vector_store %arg12[%c3, %c0_40, %c0_41], %183 {strides = array<i32>} : memref<5x16x128xf32, #tpu.memory_space<vmem>>, vector<1x16x128xf32>,
    %c4 = arith.constant 4 : index
    %c0_42 = arith.constant 0 : index
    %c0_43 = arith.constant 0 : index
    %184 = vector.load %arg12[%c4, %c0_42, %c0_43] : memref<5x16x128xf32, #tpu.memory_space<vmem>>, vector<1x16x128xf32>
    %185 = vector.shape_cast %184 : vector<1x16x128xf32> to vector<16x128xf32>
    %186 = vector.shape_cast %171 : vector<16x128xf32> to vector<1x16x128xf32>
    tpu.vector_store %arg12[%c4, %c0_42, %c0_43], %186 {strides = array<i32>} : memref<5x16x128xf32, #tpu.memory_space<vmem>>, vector<1x16x128xf32>,
    return
  }
  func.func @transform_0(%arg0: i32) -> (i32, i32) {
    %c0_i32 = arith.constant 0 : i32
    %c0_i32_0 = arith.constant 0 : i32
    return %arg0, %c0_i32 : i32, i32
  }
  func.func @transform_1(%arg0: i32) -> (i32, i32) {
    %c0_i32 = arith.constant 0 : i32
    %c0_i32_0 = arith.constant 0 : i32
    return %arg0, %c0_i32 : i32, i32
  }
  func.func @transform_2(%arg0: i32) -> (i32, i32, i32) {
    %c0_i32 = arith.constant 0 : i32
    %c0_i32_0 = arith.constant 0 : i32
    %c0_i32_1 = arith.constant 0 : i32
    return %arg0, %c0_i32, %c0_i32_0 : i32, i32, i32
  }
  func.func @transform_3(%arg0: i32) -> (i32, i32, i32) {
    %c0_i32 = arith.constant 0 : i32
    %c0_i32_0 = arith.constant 0 : i32
    %c0_i32_1 = arith.constant 0 : i32
    return %arg0, %c0_i32, %c0_i32_0 : i32, i32, i32
  }
  func.func @transform_4(%arg0: i32) -> (i32, i32) {
    %c0_i32 = arith.constant 0 : i32
    %c0_i32_0 = arith.constant 0 : i32
    return %arg0, %c0_i32 : i32, i32
  }
  func.func @transform_5(%arg0: i32) -> (i32, i32) {
    %c0_i32 = arith.constant 0 : i32
    %c0_i32_0 = arith.constant 0 : i32
    return %arg0, %c0_i32 : i32, i32
  }
  func.func @transform_6(%arg0: i32) -> (i32, i32) {
    %c0_i32 = arith.constant 0 : i32
    %c0_i32_0 = arith.constant 0 : i32
    return %arg0, %c0_i32 : i32, i32
  }
  func.func @transform_7(%arg0: i32) -> (i32, i32) {
    %c0_i32 = arith.constant 0 : i32
    %c0_i32_0 = arith.constant 0 : i32
    %c0_i32_1 = arith.constant 0 : i32
    return %c0_i32, %c0_i32_0 : i32, i32
  }
  func.func @transform_8(%arg0: i32) -> (i32, i32) {
    %c0_i32 = arith.constant 0 : i32
    %c0_i32_0 = arith.constant 0 : i32
    return %arg0, %c0_i32 : i32, i32
  }
  func.func @transform_9(%arg0: i32) -> (i32, i32) {
    %c0_i32 = arith.constant 0 : i32
    %c0_i32_0 = arith.constant 0 : i32
    %c0_i32_1 = arith.constant 0 : i32
    return %c0_i32, %c0_i32_0 : i32, i32
  }
  func.func @transform_10(%arg0: i32) -> (i32, i32) {
    %c0_i32 = arith.constant 0 : i32
    %c0_i32_0 = arith.constant 0 : i32
    %c0_i32_1 = arith.constant 0 : i32
    return %c0_i32, %c0_i32_0 : i32, i32
  }
  func.func @transform_11(%arg0: i32) -> (i32, i32, i32) {
    %c0_i32 = arith.constant 0 : i32
    %c0_i32_0 = arith.constant 0 : i32
    %c0_i32_1 = arith.constant 0 : i32
    return %c0_i32, %arg0, %c0_i32_0 : i32, i32, i32
  }
}

</mosaic_0001>

<llo_original>
// kernel: _forward.1
$region0: #{_forward.1}
  #allocation0 [shape = 'u32[]', space=smem, size = 0x4, offset = 0x4, fixed_abs, tag = 'smem constant byte address 0x4 - core index']
  #allocation1 [shape = 'u32[144,128]{1,0:T(1,128)}', space=vmem, size = 0x12000, scoped, tag = 'internal scratch']
  %s0 = inlined_call_operand.vmem [shape: f32[32,128], index: 0, kind: input, shape index: {}]
  %s1 = inlined_call_operand.vmem [shape: f32[32,128], index: 1, kind: input, shape index: {}]
  %s2 = inlined_call_operand.vmem [shape: f32[2,2,128], index: 2, kind: input, shape index: {}]
  %s3 = inlined_call_operand.vmem [shape: f32[2,2,128], index: 3, kind: input, shape index: {}]
  %s4 = inlined_call_operand.vmem [shape: f32[32,128], index: 4, kind: input, shape index: {}]
  %s5 = inlined_call_operand.vmem [shape: f32[32,128], index: 5, kind: input, shape index: {}]
  %s6 = inlined_call_operand.vmem [shape: f32[32,128], index: 6, kind: input, shape index: {}]
  %s7 = inlined_call_operand.vmem [shape: f32[1,128], index: 7, kind: input, shape index: {}]
  %s8 = inlined_call_operand.vmem [shape: f32[32,6], index: 8, kind: input, shape index: {}]
  %s9 = inlined_call_operand.vmem [shape: f32[10,128], index: 9, kind: input, shape index: {}]
  %s10 = inlined_call_operand.vmem [shape: f32[10,128], index: 10, kind: input, shape index: {}]
  %s11 = inlined_call_operand.vmem [shape: f32[5,32,128], index: 11, kind: output, shape index: {}]
  %s12 = sld [smem:[#allocation0]]
  $region111: #{_forward.1} parent=0
    _
  %s14 = ssub.s32 1, %s12
  %s15 = scalar_select 0, %s14, %s12
  $region1: #{_forward.1} parent=0
    #allocation2 [shape = 'u8[81920]{0}', space=vmem, size = 0x14000, scoped, tag = 'output window, operand 0']
    loop: start=0, step=1, limit=4
    $region2: #{_forward.1} parent=1 // loop_pre_header
      _
    $region3: #{_forward.1} parent=1 // loop_header
      %s17 = sphi 0, %s21
      %p18 = scmp.ge.s32.totalorder %s17, 4
      %s27 = sphi 0, %s29
      %s30 = sphi 0, %s27
      %s31 = sphi 0, %s30
      %s47 = sphi 0, %s31
      %s53 = sphi 0, %s55
      %s56 = sphi 0, %s53
      %s57 = sphi 0, %s56
      %s73 = sphi 0, %s57
      %s79 = sphi 0, %s81
      %s82 = sphi 0, %s79
      %s83 = sphi 0, %s82
      %s99 = sphi 0, %s83
      %s105 = sphi 0, %s107
      %s108 = sphi 0, %s105
      %s109 = sphi 0, %s108
      %s125 = sphi 0, %s109
      %s131 = sphi 0, %s133
      %s134 = sphi 0, %s131
      %s135 = sphi 0, %s134
      %s151 = sphi 0, %s135
      %s157 = sphi 0, %s159
      %s160 = sphi 0, %s157
      %s161 = sphi 0, %s160
      %s177 = sphi 0, %s161
      %s183 = sphi 0, %s185
      %s186 = sphi 0, %s183
      %s187 = sphi 0, %s186
      %s203 = sphi 0, %s187
      %s207 = sphi 0, %s207
      %s209 = sphi 0, %s207
      %s210 = sphi 0, %s209
      %s224 = sphi 0, %s210
      %s230 = sphi 0, %s232
      %s233 = sphi 0, %s230
      %s234 = sphi 0, %s233
      %s250 = sphi 0, %s234
      %s254 = sphi 0, %s254
      %s256 = sphi 0, %s254
      %s257 = sphi 0, %s256
      %s271 = sphi 0, %s257
      %s275 = sphi 0, %s275
      %s277 = sphi 0, %s275
      %s278 = sphi 0, %s277
      %s292 = sphi 0, %s278
      %s298 = sphi 0, %s300
      %s301 = sphi 0, %s298
      %s302 = sphi 0, %s301
      %s318 = sphi 0, %s302
    $region4: #{_forward.1} parent=1 // loop_header_branch
      %20 = sbr.rel (%p18) target = $region8
    $region5: #{_forward.1} parent=1 // loop_body
      %s22 = ssub.s32 %s17, 1
      %s23 = ssub.s32 %s17, 2
      %s24 = sadd.s32 %s17, 1
      %s25 = ssub.s32 %s17, %s24
      %p26 = scmp.eq.s32.totalorder %s25, 0
      %s28 = sadd.s32 %s27, 1
      %s29 = scalar_select %p26, %s27, %s28
      %p32 = pneg %p26
      %p33 = scmp.eq.s32.totalorder %s17, 1
      %p34 = por %p32, %p33
      %p35 = scmp.ne.s32.totalorder %s27, %s30
      %p36 = scmp.eq.s32.totalorder %s17, 0
      %p37 = por %p35, %p36
      %p38 = scmp.ne.s32.totalorder %s27, %s30
      %p39 = scmp.eq.s32.totalorder %s22, 1
      %p40 = por %p38, %p39
      %p41 = scmp.ne.s32.totalorder %s30, %s31
      %p42 = scmp.eq.s32.totalorder %s22, 0
      %p43 = por %p41, %p42
      %p44 = scmp.ne.s32.totalorder %s30, %s31
      %p45 = scmp.eq.s32.totalorder %s23, 1
      %p46 = por %p44, %p45
      %p48 = scmp.ne.s32.totalorder %s31, %s47
      %p49 = scmp.eq.s32.totalorder %s23, 0
      %p50 = por %p48, %p49
      %s51 = ssub.s32 %s17, %s24
      %p52 = scmp.eq.s32.totalorder %s51, 0
      %s54 = sadd.s32 %s53, 1
      %s55 = scalar_select %p52, %s53, %s54
      %p58 = pneg %p52
      %p59 = scmp.eq.s32.totalorder %s17, 1
      %p60 = por %p58, %p59
      %p61 = scmp.ne.s32.totalorder %s53, %s56
      %p62 = scmp.eq.s32.totalorder %s17, 0
      %p63 = por %p61, %p62
      %p64 = scmp.ne.s32.totalorder %s53, %s56
      %p65 = scmp.eq.s32.totalorder %s22, 1
      %p66 = por %p64, %p65
      %p67 = scmp.ne.s32.totalorder %s56, %s57
      %p68 = scmp.eq.s32.totalorder %s22, 0
      %p69 = por %p67, %p68
      %p70 = scmp.ne.s32.totalorder %s56, %s57
      %p71 = scmp.eq.s32.totalorder %s23, 1
      %p72 = por %p70, %p71
      %p74 = scmp.ne.s32.totalorder %s57, %s73
      %p75 = scmp.eq.s32.totalorder %s23, 0
      %p76 = por %p74, %p75
      %s77 = ssub.s32 %s17, %s24
      %p78 = scmp.eq.s32.totalorder %s77, 0
      %s80 = sadd.s32 %s79, 1
      %s81 = scalar_select %p78, %s79, %s80
      %p84 = pneg %p78
      %p85 = scmp.eq.s32.totalorder %s17, 1
      %p86 = por %p84, %p85
      %p87 = scmp.ne.s32.totalorder %s79, %s82
      %p88 = scmp.eq.s32.totalorder %s17, 0
      %p89 = por %p87, %p88
      %p90 = scmp.ne.s32.totalorder %s79, %s82
      %p91 = scmp.eq.s32.totalorder %s22, 1
      %p92 = por %p90, %p91
      %p93 = scmp.ne.s32.totalorder %s82, %s83
      %p94 = scmp.eq.s32.totalorder %s22, 0
      %p95 = por %p93, %p94
      %p96 = scmp.ne.s32.totalorder %s82, %s83
      %p97 = scmp.eq.s32.totalorder %s23, 1
      %p98 = por %p96, %p97
      %p100 = scmp.ne.s32.totalorder %s83, %s99
      %p101 = scmp.eq.s32.totalorder %s23, 0
      %p102 = por %p100, %p101
      %s103 = ssub.s32 %s17, %s24
      %p104 = scmp.eq.s32.totalorder %s103, 0
      %s106 = sadd.s32 %s105, 1
      %s107 = scalar_select %p104, %s105, %s106
      %p110 = pneg %p104
      %p111 = scmp.eq.s32.totalorder %s17, 1
      %p112 = por %p110, %p111
      %p113 = scmp.ne.s32.totalorder %s105, %s108
      %p114 = scmp.eq.s32.totalorder %s17, 0
      %p115 = por %p113, %p114
      %p116 = scmp.ne.s32.totalorder %s105, %s108
      %p117 = scmp.eq.s32.totalorder %s22, 1
      %p118 = por %p116, %p117
      %p119 = scmp.ne.s32.totalorder %s108, %s109
      %p120 = scmp.eq.s32.totalorder %s22, 0
      %p121 = por %p119, %p120
      %p122 = scmp.ne.s32.totalorder %s108, %s109
      %p123 = scmp.eq.s32.totalorder %s23, 1
      %p124 = por %p122, %p123
      %p126 = scmp.ne.s32.totalorder %s109, %s125
      %p127 = scmp.eq.s32.totalorder %s23, 0
      %p128 = por %p126, %p127
      %s129 = ssub.s32 %s17, %s24
      %p130 = scmp.eq.s32.totalorder %s129, 0
      %s132 = sadd.s32 %s131, 1
      %s133 = scalar_select %p130, %s131, %s132
      %p136 = pneg %p130
      %p137 = scmp.eq.s32.totalorder %s17, 1
      %p138 = por %p136, %p137
      %p139 = scmp.ne.s32.totalorder %s131, %s134
      %p140 = scmp.eq.s32.totalorder %s17, 0
      %p141 = por %p139, %p140
      %p142 = scmp.ne.s32.totalorder %s131, %s134
      %p143 = scmp.eq.s32.totalorder %s22, 1
      %p144 = por %p142, %p143
      %p145 = scmp.ne.s32.totalorder %s134, %s135
      %p146 = scmp.eq.s32.totalorder %s22, 0
      %p147 = por %p145, %p146
      %p148 = scmp.ne.s32.totalorder %s134, %s135
      %p149 = scmp.eq.s32.totalorder %s23, 1
      %p150 = por %p148, %p149
      %p152 = scmp.ne.s32.totalorder %s135, %s151
      %p153 = scmp.eq.s32.totalorder %s23, 0
      %p154 = por %p152, %p153
      %s155 = ssub.s32 %s17, %s24
      %p156 = scmp.eq.s32.totalorder %s155, 0
      %s158 = sadd.s32 %s157, 1
      %s159 = scalar_select %p156, %s157, %s158
      %p162 = pneg %p156
      %p163 = scmp.eq.s32.totalorder %s17, 1
      %p164 = por %p162, %p163
      %p165 = scmp.ne.s32.totalorder %s157, %s160
      %p166 = scmp.eq.s32.totalorder %s17, 0
      %p167 = por %p165, %p166
      %p168 = scmp.ne.s32.totalorder %s157, %s160
      %p169 = scmp.eq.s32.totalorder %s22, 1
      %p170 = por %p168, %p169
      %p171 = scmp.ne.s32.totalorder %s160, %s161
      %p172 = scmp.eq.s32.totalorder %s22, 0
      %p173 = por %p171, %p172
      %p174 = scmp.ne.s32.totalorder %s160, %s161
      %p175 = scmp.eq.s32.totalorder %s23, 1
      %p176 = por %p174, %p175
      %p178 = scmp.ne.s32.totalorder %s161, %s177
      %p179 = scmp.eq.s32.totalorder %s23, 0
      %p180 = por %p178, %p179
      %s181 = ssub.s32 %s17, %s24
      %p182 = scmp.eq.s32.totalorder %s181, 0
      %s184 = sadd.s32 %s183, 1
      %s185 = scalar_select %p182, %s183, %s184
      %p188 = pneg %p182
      %p189 = scmp.eq.s32.totalorder %s17, 1
      %p190 = por %p188, %p189
      %p191 = scmp.ne.s32.totalorder %s183, %s186
      %p192 = scmp.eq.s32.totalorder %s17, 0
      %p193 = por %p191, %p192
      %p194 = scmp.ne.s32.totalorder %s183, %s186
      %p195 = scmp.eq.s32.totalorder %s22, 1
      %p196 = por %p194, %p195
      %p197 = scmp.ne.s32.totalorder %s186, %s187
      %p198 = scmp.eq.s32.totalorder %s22, 0
      %p199 = por %p197, %p198
      %p200 = scmp.ne.s32.totalorder %s186, %s187
      %p201 = scmp.eq.s32.totalorder %s23, 1
      %p202 = por %p200, %p201
      %p204 = scmp.ne.s32.totalorder %s187, %s203
      %p205 = scmp.eq.s32.totalorder %s23, 0
      %p206 = por %p204, %p205
      %s208 = sadd.s32 %s207, 1
      %p211 = scmp.eq.s32.totalorder %s17, 1
      %p212 = scmp.ne.s32.totalorder %s207, %s209
      %p213 = scmp.eq.s32.totalorder %s17, 0
      %p214 = por %p212, %p213
      %p215 = scmp.ne.s32.totalorder %s207, %s209
      %p216 = scmp.eq.s32.totalorder %s22, 1
      %p217 = por %p215, %p216
      %p218 = scmp.ne.s32.totalorder %s209, %s210
      %p219 = scmp.eq.s32.totalorder %s22, 0
      %p220 = por %p218, %p219
      %p221 = scmp.ne.s32.totalorder %s209, %s210
      %p222 = scmp.eq.s32.totalorder %s23, 1
      %p223 = por %p221, %p222
      %p225 = scmp.ne.s32.totalorder %s210, %s224
      %p226 = scmp.eq.s32.totalorder %s23, 0
      %p227 = por %p225, %p226
      %s228 = ssub.s32 %s17, %s24
      %p229 = scmp.eq.s32.totalorder %s228, 0
      %s231 = sadd.s32 %s230, 1
      %s232 = scalar_select %p229, %s230, %s231
      %p235 = pneg %p229
      %p236 = scmp.eq.s32.totalorder %s17, 1
      %p237 = por %p235, %p236
      %p238 = scmp.ne.s32.totalorder %s230, %s233
      %p239 = scmp.eq.s32.totalorder %s17, 0
      %p240 = por %p238, %p239
      %p241 = scmp.ne.s32.totalorder %s230, %s233
      %p242 = scmp.eq.s32.totalorder %s22, 1
      %p243 = por %p241, %p242
      %p244 = scmp.ne.s32.totalorder %s233, %s234
      %p245 = scmp.eq.s32.totalorder %s22, 0
      %p246 = por %p244, %p245
      %p247 = scmp.ne.s32.totalorder %s233, %s234
      %p248 = scmp.eq.s32.totalorder %s23, 1
      %p249 = por %p247, %p248
      %p251 = scmp.ne.s32.totalorder %s234, %s250
      %p252 = scmp.eq.s32.totalorder %s23, 0
      %p253 = por %p251, %p252
      %s255 = sadd.s32 %s254, 1
      %p258 = scmp.eq.s32.totalorder %s17, 1
      %p259 = scmp.ne.s32.totalorder %s254, %s256
      %p260 = scmp.eq.s32.totalorder %s17, 0
      %p261 = por %p259, %p260
      %p262 = scmp.ne.s32.totalorder %s254, %s256
      %p263 = scmp.eq.s32.totalorder %s22, 1
      %p264 = por %p262, %p263
      %p265 = scmp.ne.s32.totalorder %s256, %s257
      %p266 = scmp.eq.s32.totalorder %s22, 0
      %p267 = por %p265, %p266
      %p268 = scmp.ne.s32.totalorder %s256, %s257
      %p269 = scmp.eq.s32.totalorder %s23, 1
      %p270 = por %p268, %p269
      %p272 = scmp.ne.s32.totalorder %s257, %s271
      %p273 = scmp.eq.s32.totalorder %s23, 0
      %p274 = por %p272, %p273
      %s276 = sadd.s32 %s275, 1
      %p279 = scmp.eq.s32.totalorder %s17, 1
      %p280 = scmp.ne.s32.totalorder %s275, %s277
      %p281 = scmp.eq.s32.totalorder %s17, 0
      %p282 = por %p280, %p281
      %p283 = scmp.ne.s32.totalorder %s275, %s277
      %p284 = scmp.eq.s32.totalorder %s22, 1
      %p285 = por %p283, %p284
      %p286 = scmp.ne.s32.totalorder %s277, %s278
      %p287 = scmp.eq.s32.totalorder %s22, 0
      %p288 = por %p286, %p287
      %p289 = scmp.ne.s32.totalorder %s277, %s278
      %p290 = scmp.eq.s32.totalorder %s23, 1
      %p291 = por %p289, %p290
      %p293 = scmp.ne.s32.totalorder %s278, %s292
      %p294 = scmp.eq.s32.totalorder %s23, 0
      %p295 = por %p293, %p294
      %s296 = ssub.s32 %s17, %s24
      %p297 = scmp.eq.s32.totalorder %s296, 0
      %s299 = sadd.s32 %s298, 1
      %s300 = scalar_select %p297, %s298, %s299
      %p303 = pneg %p297
      %p304 = scmp.eq.s32.totalorder %s17, 1
      %p305 = por %p303, %p304
      %p306 = scmp.ne.s32.totalorder %s298, %s301
      %p307 = scmp.eq.s32.totalorder %s17, 0
      %p308 = por %p306, %p307
      %p309 = scmp.ne.s32.totalorder %s298, %s301
      %p310 = scmp.eq.s32.totalorder %s22, 1
      %p311 = por %p309, %p310
      %p312 = scmp.ne.s32.totalorder %s301, %s302
      %p313 = scmp.eq.s32.totalorder %s22, 0
      %p314 = por %p312, %p313
      %p315 = scmp.ne.s32.totalorder %s301, %s302
      %p316 = scmp.eq.s32.totalorder %s23, 1
      %p317 = por %p315, %p316
      %p319 = scmp.ne.s32.totalorder %s302, %s318
      %p320 = scmp.eq.s32.totalorder %s23, 0
      %p321 = por %p319, %p320
      %p322 = scmp.le.s32.totalorder 1, %s17
      %p323 = scmp.lt.s32.totalorder %s17, 3
      %p324 = pnand %p322, %p323
      %p325 = pneg %p324
      // Predicated region
      $region9: #{_forward.1} parent=5 // pred_check
        _
      $region10: #{_forward.1} parent=5 // pred_check_branch
        %327 = sbr.rel (%p324) target = $region12
      $region11: #{_forward.1} parent=5 // pred_region
        %s328 = ssub.s32 %s17, 1
        // Predicated region
        $region13: #{_forward.1} parent=11 // pred_check
          %p329 = pneg %p220
        $region14: #{_forward.1} parent=11 // pred_check_branch
          %331 = sbr.rel (%p329) target = $region16
        $region15: #{_forward.1} parent=11 // pred_region
          _
        $region16: #{_forward.1} parent=11 // pred_fallthru
          _
        // Predicated region
        $region17: #{_forward.1} parent=11 // pred_check
          %p332 = pneg %p267
        $region18: #{_forward.1} parent=11 // pred_check_branch
          %334 = sbr.rel (%p332) target = $region20
        $region19: #{_forward.1} parent=11 // pred_region
          _
        $region20: #{_forward.1} parent=11 // pred_fallthru
          _
        // Predicated region
        $region21: #{_forward.1} parent=11 // pred_check
          %p335 = pneg %p288
        $region22: #{_forward.1} parent=11 // pred_check_branch
          %337 = sbr.rel (%p335) target = $region24
        $region23: #{_forward.1} parent=11 // pred_region
          _
        $region24: #{_forward.1} parent=11 // pred_fallthru
          _
      $region12: #{_forward.1} parent=5 // pred_fallthru
        _
      %p338 = scmp.lt.s32.totalorder %s17, 2
      // Predicated region
      $region25: #{_forward.1} parent=5 // pred_check
        %p339 = pneg %p338
      $region26: #{_forward.1} parent=5 // pred_check_branch
        %341 = sbr.rel (%p339) target = $region28
      $region27: #{_forward.1} parent=5 // pred_region
        // Predicated region
        $region29: #{_forward.1} parent=27 // pred_check
          %p342 = pneg %p37
        $region30: #{_forward.1} parent=27 // pred_check_branch
          %344 = sbr.rel (%p342) target = $region32
        $region31: #{_forward.1} parent=27 // pred_region
          %s345 = smul.u32 2, %s17
          %p346 = scmp.lt.s32.totalorder %s345, 3
          %s347 = scalar_select %p346, %s345, 3
          %s348 = smul.addr %s347, 8
          %s349 = scalar_lea.vmem %s0, %s348
          %s350 = smul.u32 2, %s17
        $region32: #{_forward.1} parent=27 // pred_fallthru
          _
        // Predicated region
        $region33: #{_forward.1} parent=27 // pred_check
          %p351 = pneg %p63
        $region34: #{_forward.1} parent=27 // pred_check_branch
          %353 = sbr.rel (%p351) target = $region36
        $region35: #{_forward.1} parent=27 // pred_region
          %s354 = smul.u32 2, %s17
          %p355 = scmp.lt.s32.totalorder %s354, 3
          %s356 = scalar_select %p355, %s354, 3
          %s357 = smul.addr %s356, 8
          %s358 = scalar_lea.vmem %s1, %s357
          %s359 = smul.u32 2, %s17
        $region36: #{_forward.1} parent=27 // pred_fallthru
          _
        // Predicated region
        $region37: #{_forward.1} parent=27 // pred_check
          %p360 = pneg %p89
        $region38: #{_forward.1} parent=27 // pred_check_branch
          %362 = sbr.rel (%p360) target = $region40
        $region39: #{_forward.1} parent=27 // pred_region
          %p363 = scmp.lt.s32.totalorder %s17, 1
          %s364 = scalar_select %p363, %s17, 1
          %s365 = smul.addr %s364, 2
          %s366 = scalar_lea.vmem %s2, %s365
        $region40: #{_forward.1} parent=27 // pred_fallthru
          _
        // Predicated region
        $region41: #{_forward.1} parent=27 // pred_check
          %p367 = pneg %p115
        $region42: #{_forward.1} parent=27 // pred_check_branch
          %369 = sbr.rel (%p367) target = $region44
        $region43: #{_forward.1} parent=27 // pred_region
          %p370 = scmp.lt.s32.totalorder %s17, 1
          %s371 = scalar_select %p370, %s17, 1
          %s372 = smul.addr %s371, 2
          %s373 = scalar_lea.vmem %s3, %s372
        $region44: #{_forward.1} parent=27 // pred_fallthru
          _
        // Predicated region
        $region45: #{_forward.1} parent=27 // pred_check
          %p374 = pneg %p141
        $region46: #{_forward.1} parent=27 // pred_check_branch
          %376 = sbr.rel (%p374) target = $region48
        $region47: #{_forward.1} parent=27 // pred_region
          %s377 = smul.u32 2, %s17
          %p378 = scmp.lt.s32.totalorder %s377, 3
          %s379 = scalar_select %p378, %s377, 3
          %s380 = smul.addr %s379, 8
          %s381 = scalar_lea.vmem %s4, %s380
          %s382 = smul.u32 2, %s17
        $region48: #{_forward.1} parent=27 // pred_fallthru
          _
        // Predicated region
        $region49: #{_forward.1} parent=27 // pred_check
          %p383 = pneg %p167
        $region50: #{_forward.1} parent=27 // pred_check_branch
          %385 = sbr.rel (%p383) target = $region52
        $region51: #{_forward.1} parent=27 // pred_region
          %s386 = smul.u32 2, %s17
          %p387 = scmp.lt.s32.totalorder %s386, 3
          %s388 = scalar_select %p387, %s386, 3
          %s389 = smul.addr %s388, 8
          %s390 = scalar_lea.vmem %s5, %s389
          %s391 = smul.u32 2, %s17
        $region52: #{_forward.1} parent=27 // pred_fallthru
          _
        // Predicated region
        $region53: #{_forward.1} parent=27 // pred_check
          %p392 = pneg %p193
        $region54: #{_forward.1} parent=27 // pred_check_branch
          %394 = sbr.rel (%p392) target = $region56
        $region55: #{_forward.1} parent=27 // pred_region
          %s395 = smul.u32 2, %s17
          %p396 = scmp.lt.s32.totalorder %s395, 3
          %s397 = scalar_select %p396, %s395, 3
          %s398 = smul.addr %s397, 8
          %s399 = scalar_lea.vmem %s6, %s398
          %s400 = smul.u32 2, %s17
        $region56: #{_forward.1} parent=27 // pred_fallthru
          _
        // Predicated region
        $region57: #{_forward.1} parent=27 // pred_check
          %p401 = pneg %p240
        $region58: #{_forward.1} parent=27 // pred_check_branch
          %403 = sbr.rel (%p401) target = $region60
        $region59: #{_forward.1} parent=27 // pred_region
          %s404 = smul.u32 2, %s17
          %p405 = scmp.lt.s32.totalorder %s404, 3
          %s406 = scalar_select %p405, %s404, 3
          %s407 = smul.addr %s406, 8
          %s408 = scalar_lea.vmem %s8, %s407
          %s409 = smul.u32 2, %s17
        $region60: #{_forward.1} parent=27 // pred_fallthru
          _
      $region28: #{_forward.1} parent=5 // pred_fallthru
        _
      %p410 = scmp.le.s32.totalorder 1, %s17
      %p411 = scmp.lt.s32.totalorder %s17, 3
      %p412 = pnand %p410, %p411
      %p413 = pneg %p412
      // Predicated region
      $region61: #{_forward.1} parent=5 // pred_check
        _
      $region62: #{_forward.1} parent=5 // pred_check_branch
        %415 = sbr.rel (%p412) target = $region64
      $region63: #{_forward.1} parent=5 // pred_region
        %s416 = ssub.s32 %s17, 1
        %s417 = smul.u32 2, %s22
        %p418 = scmp.lt.s32.totalorder %s417, 3
        %s419 = scalar_select %p418, %s417, 3
        %s420 = smul.addr %s419, 8
        %s421 = scalar_lea.vmem %s0, %s420
        %p422 = pneg %p43
        %p423 = pneg %p40
        %s424 = smul.u32 2, %s22
        %p425 = scmp.lt.s32.totalorder %s424, 3
        %s426 = scalar_select %p425, %s424, 3
        %s427 = smul.addr %s426, 8
        %s428 = scalar_lea.vmem %s1, %s427
        %p429 = pneg %p69
        %p430 = pneg %p66
        %p431 = scmp.lt.s32.totalorder %s22, 1
        %s432 = scalar_select %p431, %s22, 1
        %s433 = smul.addr %s432, 2
        %s434 = scalar_lea.vmem %s2, %s433
        %p435 = pneg %p95
        %p436 = pneg %p92
        %p437 = scmp.lt.s32.totalorder %s22, 1
        %s438 = scalar_select %p437, %s22, 1
        %s439 = smul.addr %s438, 2
        %s440 = scalar_lea.vmem %s3, %s439
        %p441 = pneg %p121
        %p442 = pneg %p118
        %s443 = smul.u32 2, %s22
        %p444 = scmp.lt.s32.totalorder %s443, 3
        %s445 = scalar_select %p444, %s443, 3
        %s446 = smul.addr %s445, 8
        %s447 = scalar_lea.vmem %s4, %s446
        %p448 = pneg %p147
        %p449 = pneg %p144
        %s450 = smul.u32 2, %s22
        %p451 = scmp.lt.s32.totalorder %s450, 3
        %s452 = scalar_select %p451, %s450, 3
        %s453 = smul.addr %s452, 8
        %s454 = scalar_lea.vmem %s5, %s453
        %p455 = pneg %p173
        %p456 = pneg %p170
        %s457 = smul.u32 2, %s22
        %p458 = scmp.lt.s32.totalorder %s457, 3
        %s459 = scalar_select %p458, %s457, 3
        %s460 = smul.addr %s459, 8
        %s461 = scalar_lea.vmem %s6, %s460
        %p462 = pneg %p199
        %p463 = pneg %p196
        %p464 = pneg %p220
        %p465 = pneg %p217
        %s466 = smul.u32 2, %s22
        %p467 = scmp.lt.s32.totalorder %s466, 3
        %s468 = scalar_select %p467, %s466, 3
        %s469 = smul.addr %s468, 8
        %s470 = scalar_lea.vmem %s8, %s469
        %p471 = pneg %p246
        %p472 = pneg %p243
        %p473 = pneg %p267
        %p474 = pneg %p264
        %p475 = pneg %p288
        %p476 = pneg %p285
        %p477 = pneg %p314
        %p478 = pneg %p311
        %s479 = sand.u32 %s301, 1
        %s480 = sand.u32 %s301, 1
        %s481 = smul.addr %s480, 80
        %s482 = scalar_lea.vmem [#allocation2], %s481
        %s483 = smul.u32 2, %s22
        %p484 = scmp.lt.s32.totalorder %s483, 3
        %s485 = scalar_select %p484, %s483, 3
        %s486 = smul.addr %s485, 8
        %s487 = scalar_lea.vmem %s0, %s486
        %s488 = smul.u32 2, %s22
        %s489 = smul.u32 2, %s22
        %p490 = scmp.lt.s32.totalorder %s489, 3
        %s491 = scalar_select %p490, %s489, 3
        %s492 = smul.addr %s491, 8
        %s493 = scalar_lea.vmem %s1, %s492
        %s494 = smul.u32 2, %s22
        %p495 = scmp.lt.s32.totalorder %s22, 1
        %s496 = scalar_select %p495, %s22, 1
        %s497 = smul.addr %s496, 2
        %s498 = scalar_lea.vmem %s2, %s497
        %p499 = scmp.lt.s32.totalorder %s22, 1
        %s500 = scalar_select %p499, %s22, 1
        %s501 = smul.addr %s500, 2
        %s502 = scalar_lea.vmem %s3, %s501
        %s503 = smul.u32 2, %s22
        %p504 = scmp.lt.s32.totalorder %s503, 3
        %s505 = scalar_select %p504, %s503, 3
        %s506 = smul.addr %s505, 8
        %s507 = scalar_lea.vmem %s4, %s506
        %s508 = smul.u32 2, %s22
        %s509 = smul.u32 2, %s22
        %p510 = scmp.lt.s32.totalorder %s509, 3
        %s511 = scalar_select %p510, %s509, 3
        %s512 = smul.addr %s511, 8
        %s513 = scalar_lea.vmem %s5, %s512
        %s514 = smul.u32 2, %s22
        %s515 = smul.u32 2, %s22
        %p516 = scmp.lt.s32.totalorder %s515, 3
        %s517 = scalar_select %p516, %s515, 3
        %s518 = smul.addr %s517, 8
        %s519 = scalar_lea.vmem %s6, %s518
        %s520 = smul.u32 2, %s22
        %s521 = smul.u32 2, %s22
        %p522 = scmp.lt.s32.totalorder %s521, 3
        %s523 = scalar_select %p522, %s521, 3
        %s524 = smul.addr %s523, 8
        %s525 = scalar_lea.vmem %s8, %s524
        %s526 = smul.u32 2, %s22
        %s527 = smul.u32 2, %s22
        %v528 = vld [vmem:[%s493] sm:$0xff]
        %v529 = vld [vmem:[%s493 + $0x8] sm:$0xff]
        %v530 = vld [vmem:[%s487] sm:$0xff]
        %v531 = vld [vmem:[%s487 + $0x8] sm:$0xff]
        %v532 = vld [vmem:[%s498] sm:$0x3]
        %v533 = vld [vmem:[%s502] sm:$0x3]
        %vm536 = vcmask 1041408
        %v537 = vrot.slane %v528, 6
        %v538 = vrot.slane %v529, 6
        %v539 = vsel %vm536, %v537, %v538
        %v544 = vrot.slane %v533, 6
        %v546 = vsel %vm536, %v532, %v537
        %v547 = vsel %vm536, %v538, %v544
        %v548 = vld [vmem:[%s525] sm:$0xff]
        %v549 = vld [vmem:[%s525 + $0x8] sm:$0xff]
        %551 = vset.pattern.permute.xlu0 0
        %552 = vperm.xlu0 %551, %v548
        %v553 = vpop.permute.xlu0 %552
        %556 = vset.pattern.permute.xlu0 0
        %557 = vperm.xlu0 %556, %v549
        %v558 = vpop.permute.xlu0 %557
        %v560 = vmul.f32 %v553, %v546
        %v561 = vmul.f32 %v558, %v539
        %562 = vset.pattern.permute.xlu0 1
        %563 = vperm.xlu0 %562, %v548
        %v564 = vpop.permute.xlu0 %563
        %566 = vset.pattern.permute.xlu0 1
        %567 = vperm.xlu0 %566, %v549
        %v568 = vpop.permute.xlu0 %567
        %vm572 = vcmask 1046528
        %v573 = vrot.slane %v546, 1
        %v574 = vrot.slane %v539, 1
        %v575 = vsel %vm572, %v573, %v574
        %v576 = vrot.slane %v547, 1
        %v577 = vsel %vm572, %v574, %v576
        %v580 = vmul.f32 %v564, %v575
        %v581 = vmul.f32 %v568, %v577
        %v582 = vadd.f32 %v560, %v580
        %v583 = vadd.f32 %v561, %v581
        %584 = vset.pattern.permute.xlu0 2
        %585 = vperm.xlu0 %584, %v548
        %v586 = vpop.permute.xlu0 %585
        %588 = vset.pattern.permute.xlu0 2
        %589 = vperm.xlu0 %588, %v549
        %v590 = vpop.permute.xlu0 %589
        %v592 = vmul.f32 %v586, %v528
        %v593 = vmul.f32 %v590, %v529
        %v594 = vadd.f32 %v582, %v592
        %v595 = vadd.f32 %v583, %v593
        %596 = vset.pattern.permute.xlu0 3
        %597 = vperm.xlu0 %596, %v548
        %v598 = vpop.permute.xlu0 %597
        %600 = vset.pattern.permute.xlu0 3
        %601 = vperm.xlu0 %600, %v549
        %v602 = vpop.permute.xlu0 %601
        %v604 = vmul.f32 %v598, %v528
        %v605 = vmul.f32 %v602, %v529
        %606 = vset.pattern.permute.xlu0 4
        %607 = vperm.xlu0 %606, %v548
        %v608 = vpop.permute.xlu0 %607
        %610 = vset.pattern.permute.xlu0 4
        %611 = vperm.xlu0 %610, %v549
        %v612 = vpop.permute.xlu0 %611
        %vm614 = vcmask 1044480
        %v615 = vrot.slane %v546, 3
        %v616 = vrot.slane %v539, 3
        %v617 = vsel %vm614, %v615, %v616
        %v618 = vrot.slane %v547, 3
        %v619 = vsel %vm614, %v616, %v618
        %v622 = vmul.f32 %v608, %v617
        %v623 = vmul.f32 %v612, %v619
        %v624 = vadd.f32 %v604, %v622
        %v625 = vadd.f32 %v605, %v623
        %626 = vset.pattern.permute.xlu0 5
        %627 = vperm.xlu0 %626, %v548
        %v628 = vpop.permute.xlu0 %627
        %630 = vset.pattern.permute.xlu0 5
        %631 = vperm.xlu0 %630, %v549
        %v632 = vpop.permute.xlu0 %631
        %vm634 = vcmask 1043456
        %v635 = vrot.slane %v546, 4
        %v636 = vrot.slane %v539, 4
        %v637 = vsel %vm634, %v635, %v636
        %v638 = vrot.slane %v547, 4
        %v639 = vsel %vm634, %v636, %v638
        %v642 = vmul.f32 %v628, %v637
        %v643 = vmul.f32 %v632, %v639
        %v644 = vadd.f32 %v624, %v642
        %v645 = vadd.f32 %v625, %v643
        %v646 = vld [vmem:[%s507] sm:$0xff]
        %v647 = vld [vmem:[%s507 + $0x8] sm:$0xff]
        %v648 = vmax.f32 %v646, -40.0
        %v649 = vmax.f32 %v647, -40.0
        %v650 = vmin.f32 %v648, 40.0
        %v651 = vmin.f32 %v649, 40.0
        %v652 = vld [vmem:[%s7] sm:$0x1]
        %v654 = vlaneseq
        %v655 = vshrl.u32 %v654, 7
        %v656 = vsub.s32 0, %v655
        %v657 = vrot.slane %v652, %v656
        %v659 = vmul.f32 %v650, %v657
        %v660 = vmul.f32 %v651, %v657
        %vm661 = vcmp.ge.f32.partialorder %v650, 0.0
        %vm662 = vcmp.ge.f32.partialorder %v651, 0.0
        %v663 = vsel %vm661, %v594, %v644
        %v664 = vsel %vm662, %v595, %v645
        %v665 = vmul.f32 %v659, %v663
        %v666 = vmul.f32 %v660, %v664
        %v667 = vsub.f32 %v530, %v665
        %v668 = vsub.f32 %v531, %v666
        %v669 = vld [vmem:[%s9] sm:$0xff]
        %v670 = vld [vmem:[%s9 + $0x8] sm:$0x3]
        %671 = vrot.lane.b32.xlu0 %v528, 16
        %v672 = vpop.permute.xlu0 %671
        %673 = vrot.lane.b32.xlu0 %v529, 16
        %v674 = vpop.permute.xlu0 %673
        %677 = vrot.lane.b32.xlu0 %v528, 8
        %v678 = vpop.permute.xlu0 %677
        %679 = vrot.lane.b32.xlu0 %v529, 8
        %v680 = vpop.permute.xlu0 %679
        %683 = vrot.lane.b32.xlu0 %v528, 120
        %v684 = vpop.permute.xlu0 %683
        %685 = vrot.lane.b32.xlu0 %v529, 120
        %v686 = vpop.permute.xlu0 %685
        %689 = vrot.lane.b32.xlu0 %v528, 112
        %v690 = vpop.permute.xlu0 %689
        %691 = vrot.lane.b32.xlu0 %v529, 112
        %v692 = vpop.permute.xlu0 %691
        %v695 = vlaneseq
        %v696 = vshrl.u32 %v695, 7
        %v697 = vsub.s32 0, %v696
        %v698 = vrot.slane %v669, %v697
        %v699 = vmul.f32 %v698, %v672
        %v700 = vmul.f32 %v698, %v674
        %v701 = vlaneseq
        %v702 = vshrl.u32 %v701, 7
        %v703 = vsub.s32 1, %v702
        %v704 = vrot.slane %v669, %v703
        %v705 = vmul.f32 %v704, %v678
        %v706 = vmul.f32 %v704, %v680
        %v707 = vadd.f32 %v699, %v705
        %v708 = vadd.f32 %v700, %v706
        %v709 = vlaneseq
        %v710 = vshrl.u32 %v709, 7
        %v711 = vsub.s32 2, %v710
        %v712 = vrot.slane %v669, %v711
        %v713 = vmul.f32 %v712, %v528
        %v714 = vmul.f32 %v712, %v529
        %v715 = vadd.f32 %v707, %v713
        %v716 = vadd.f32 %v708, %v714
        %v717 = vlaneseq
        %v718 = vshrl.u32 %v717, 7
        %v719 = vsub.s32 3, %v718
        %v720 = vrot.slane %v669, %v719
        %v721 = vmul.f32 %v720, %v684
        %v722 = vmul.f32 %v720, %v686
        %v723 = vadd.f32 %v715, %v721
        %v724 = vadd.f32 %v716, %v722
        %v725 = vlaneseq
        %v726 = vshrl.u32 %v725, 7
        %v727 = vsub.s32 4, %v726
        %v728 = vrot.slane %v669, %v727
        %v729 = vmul.f32 %v728, %v690
        %v730 = vmul.f32 %v728, %v692
        %v731 = vadd.f32 %v723, %v729
        %v732 = vadd.f32 %v724, %v730
        %v733 = vlaneseq
        %v734 = vshrl.u32 %v733, 7
        %v735 = vsub.s32 5, %v734
        %v736 = vrot.slane %v669, %v735
        %v737 = vmul.f32 %v736, %v672
        %v738 = vmul.f32 %v736, %v674
        %v739 = vlaneseq
        %v740 = vshrl.u32 %v739, 7
        %v741 = vsub.s32 6, %v740
        %v742 = vrot.slane %v669, %v741
        %v743 = vmul.f32 %v742, %v678
        %v744 = vmul.f32 %v742, %v680
        %v745 = vadd.f32 %v737, %v743
        %v746 = vadd.f32 %v738, %v744
        %v747 = vlaneseq
        %v748 = vshrl.u32 %v747, 7
        %v749 = vsub.s32 7, %v748
        %v750 = vrot.slane %v669, %v749
        %v751 = vmul.f32 %v750, %v528
        %v752 = vmul.f32 %v750, %v529
        %v753 = vadd.f32 %v745, %v751
        %v754 = vadd.f32 %v746, %v752
        %v755 = vlaneseq
        %v756 = vshrl.u32 %v755, 7
        %v757 = vsub.s32 0, %v756
        %v758 = vrot.slane %v670, %v757
        %v759 = vmul.f32 %v758, %v684
        %v760 = vmul.f32 %v758, %v686
        %v761 = vadd.f32 %v753, %v759
        %v762 = vadd.f32 %v754, %v760
        %v763 = vlaneseq
        %v764 = vshrl.u32 %v763, 7
        %v765 = vsub.s32 1, %v764
        %v766 = vrot.slane %v670, %v765
        %v767 = vmul.f32 %v766, %v690
        %v768 = vmul.f32 %v766, %v692
        %v769 = vadd.f32 %v761, %v767
        %v770 = vadd.f32 %v762, %v768
        %v771 = vld [vmem:[%s513] sm:$0xff]
        %v772 = vld [vmem:[%s513 + $0x8] sm:$0xff]
        %v773 = vmax.f32 %v771, -30.0
        %v774 = vmax.f32 %v772, -30.0
        %v775 = vmin.f32 %v773, 30.0
        %v776 = vmin.f32 %v774, 30.0
        %vm777 = vcmp.ge.f32.partialorder %v775, 0.0
        %vm778 = vcmp.ge.f32.partialorder %v776, 0.0
        %v779 = vsel %vm777, %v731, %v769
        %v780 = vsel %vm778, %v732, %v770
        %v781 = vmul.f32 %v775, %v779
        %v782 = vmul.f32 %v776, %v780
        %v783 = vsub.f32 %v667, %v781
        %v784 = vsub.f32 %v668, %v782
        %v785 = vld [vmem:[%s10] sm:$0xff]
        %v786 = vld [vmem:[%s10 + $0x8] sm:$0x3]
        %787 = vrot.lane.b32.xlu0 %v528, 2
        %v788 = vpop.permute.xlu0 %787
        %789 = vrot.lane.b32.xlu0 %v529, 2
        %v790 = vpop.permute.xlu0 %789
        %793 = vrot.lane.b32.xlu0 %v528, 1
        %v794 = vpop.permute.xlu0 %793
        %795 = vrot.lane.b32.xlu0 %v529, 1
        %v796 = vpop.permute.xlu0 %795
        %799 = vrot.lane.b32.xlu0 %v528, 127
        %v800 = vpop.permute.xlu0 %799
        %801 = vrot.lane.b32.xlu0 %v529, 127
        %v802 = vpop.permute.xlu0 %801
        %805 = vrot.lane.b32.xlu0 %v528, 126
        %v806 = vpop.permute.xlu0 %805
        %807 = vrot.lane.b32.xlu0 %v529, 126
        %v808 = vpop.permute.xlu0 %807
        %v811 = vlaneseq
        %v812 = vshrl.u32 %v811, 7
        %v813 = vsub.s32 0, %v812
        %v814 = vrot.slane %v785, %v813
        %v815 = vmul.f32 %v814, %v788
        %v816 = vmul.f32 %v814, %v790
        %v817 = vlaneseq
        %v818 = vshrl.u32 %v817, 7
        %v819 = vsub.s32 1, %v818
        %v820 = vrot.slane %v785, %v819
        %v821 = vmul.f32 %v820, %v794
        %v822 = vmul.f32 %v820, %v796
        %v823 = vadd.f32 %v815, %v821
        %v824 = vadd.f32 %v816, %v822
        %v825 = vlaneseq
        %v826 = vshrl.u32 %v825, 7
        %v827 = vsub.s32 2, %v826
        %v828 = vrot.slane %v785, %v827
        %v829 = vmul.f32 %v828, %v528
        %v830 = vmul.f32 %v828, %v529
        %v831 = vadd.f32 %v823, %v829
        %v832 = vadd.f32 %v824, %v830
        %v833 = vlaneseq
        %v834 = vshrl.u32 %v833, 7
        %v835 = vsub.s32 3, %v834
        %v836 = vrot.slane %v785, %v835
        %v837 = vmul.f32 %v836, %v800
        %v838 = vmul.f32 %v836, %v802
        %v839 = vadd.f32 %v831, %v837
        %v840 = vadd.f32 %v832, %v838
        %v841 = vlaneseq
        %v842 = vshrl.u32 %v841, 7
        %v843 = vsub.s32 4, %v842
        %v844 = vrot.slane %v785, %v843
        %v845 = vmul.f32 %v844, %v806
        %v846 = vmul.f32 %v844, %v808
        %v847 = vadd.f32 %v839, %v845
        %v848 = vadd.f32 %v840, %v846
        %v849 = vlaneseq
        %v850 = vshrl.u32 %v849, 7
        %v851 = vsub.s32 5, %v850
        %v852 = vrot.slane %v785, %v851
        %v853 = vmul.f32 %v852, %v788
        %v854 = vmul.f32 %v852, %v790
        %v855 = vlaneseq
        %v856 = vshrl.u32 %v855, 7
        %v857 = vsub.s32 6, %v856
        %v858 = vrot.slane %v785, %v857
        %v859 = vmul.f32 %v858, %v794
        %v860 = vmul.f32 %v858, %v796
        %v861 = vadd.f32 %v853, %v859
        %v862 = vadd.f32 %v854, %v860
        %v863 = vlaneseq
        %v864 = vshrl.u32 %v863, 7
        %v865 = vsub.s32 7, %v864
        %v866 = vrot.slane %v785, %v865
        %v867 = vmul.f32 %v866, %v528
        %v868 = vmul.f32 %v866, %v529
        %v869 = vadd.f32 %v861, %v867
        %v870 = vadd.f32 %v862, %v868
        %v871 = vlaneseq
        %v872 = vshrl.u32 %v871, 7
        %v873 = vsub.s32 0, %v872
        %v874 = vrot.slane %v786, %v873
        %v875 = vmul.f32 %v874, %v800
        %v876 = vmul.f32 %v874, %v802
        %v877 = vadd.f32 %v869, %v875
        %v878 = vadd.f32 %v870, %v876
        %v879 = vlaneseq
        %v880 = vshrl.u32 %v879, 7
        %v881 = vsub.s32 1, %v880
        %v882 = vrot.slane %v786, %v881
        %v883 = vmul.f32 %v882, %v806
        %v884 = vmul.f32 %v882, %v808
        %v885 = vadd.f32 %v877, %v883
        %v886 = vadd.f32 %v878, %v884
        %v887 = vld [vmem:[%s519] sm:$0xff]
        %v888 = vld [vmem:[%s519 + $0x8] sm:$0xff]
        %v889 = vmax.f32 %v887, -0.3
        %v890 = vmax.f32 %v888, -0.3
        %v891 = vmin.f32 %v889, 0.3
        %v892 = vmin.f32 %v890, 0.3
        %v893 = vsub.f32 0.0, %v891
        %v894 = vsub.f32 0.0, %v892
        %vm895 = vcmp.ge.f32.partialorder %v893, 0.0
        %vm896 = vcmp.ge.f32.partialorder %v894, 0.0
        %v897 = vsel %vm895, %v847, %v885
        %v898 = vsel %vm896, %v848, %v886
        %v899 = vmul.f32 %v891, %v897
        %v900 = vmul.f32 %v892, %v898
        %v901 = vadd.f32 %v783, %v899
        %v902 = vadd.f32 %v784, %v900
        %903 = vst [vmem:[%s482] sm:$0xff] 0.0
        %904 = vst [vmem:[%s482 + $0x8] sm:$0xff] 0.0
        %s905 = scalar_lea.vmem %s482, 16 [#allocation2]
        %906 = vst [vmem:[%s905] sm:$0xff] %v901
        %907 = vst [vmem:[%s905 + $0x8] sm:$0xff] %v902
        %s908 = scalar_lea.vmem %s482, 32 [#allocation2]
        %909 = vst [vmem:[%s908] sm:$0xff] 0.0
        %910 = vst [vmem:[%s908 + $0x8] sm:$0xff] 0.0
        %s911 = scalar_lea.vmem %s482, 48 [#allocation2]
        %912 = vst [vmem:[%s911] sm:$0xff] 0.0
        %913 = vst [vmem:[%s911 + $0x8] sm:$0xff] 0.0
        %s914 = scalar_lea.vmem %s482, 64 [#allocation2]
        %915 = vst [vmem:[%s914] sm:$0xff] 0.0
        %916 = vst [vmem:[%s914 + $0x8] sm:$0xff] 0.0
        %s917 = sand.u32 %s301, 1
        %s918 = sand.u32 %s301, 1
        %s919 = smul.addr %s918, 80
        %s920 = scalar_lea.vmem [#allocation2], %s919
        // Predicated region
        $region65: #{_forward.1} parent=63 // pred_check
          %p921 = pneg %p311
        $region66: #{_forward.1} parent=63 // pred_check_branch
          %923 = sbr.rel (%p921) target = $region68
        $region67: #{_forward.1} parent=63 // pred_region
          %s924 = smul.u32 2, %s22
          %s925 = smul.addr %s924, 8
          %s926 = scalar_lea.vmem %s11, %s925
          // Predicated region
          $region69: #{_forward.1} parent=67 // pred_check
            _
          $region70: #{_forward.1} parent=67 // pred_check_branch
            %928 = sbr.rel (0) target = $region72
          $region71: #{_forward.1} parent=67 // pred_region
            // Predicated region
            $region73: #{_forward.1} parent=71 // pred_check
              _
            $region74: #{_forward.1} parent=71 // pred_check_branch
              %930 = sbr.rel (0) target = $region76
            $region75: #{_forward.1} parent=71 // pred_region
              // Predicated region
              $region88: #{_forward.1} parent=75 // pred_check
                _
              $region89: #{_forward.1} parent=75 // pred_check_branch
                %964 = sbr.rel (0) target = $region91
              $region90: #{_forward.1} parent=75 // pred_region
                loop: start=0, step=1, limit=1
                $region92: #{_forward.1} parent=90 // loop_pre_header
                  _
                $region93: #{_forward.1} parent=90 // loop_header
                  %s966 = sphi 0, %s970
                  %p967 = scmp.ge.s32.totalorder %s966, 1
                  %s971 = sphi %s920, %s920
                  %s972 = sphi %s926, %s926
                $region94: #{_forward.1} parent=90 // loop_header_branch
                  %969 = sbr.rel (%p967) target = $region98
                $region95: #{_forward.1} parent=90 // loop_body
                  %v973 = vld [vmem:[%s971] sm:$0xff]
                  %974 = vst [vmem:[%s972] sm:$0xff] %v973
                  %v975 = vld [vmem:[%s971 + $0x8] sm:$0xff]
                  %976 = vst [vmem:[%s972 + $0x8] sm:$0xff] %v975
                  %v977 = vld [vmem:[%s971 + $0x10] sm:$0xff]
                  %978 = vst [vmem:[%s972 + $0x20] sm:$0xff] %v977
                  %v979 = vld [vmem:[%s971 + $0x18] sm:$0xff]
                  %980 = vst [vmem:[%s972 + $0x28] sm:$0xff] %v979
                  %v981 = vld [vmem:[%s971 + $0x20] sm:$0xff]
                  %982 = vst [vmem:[%s972 + $0x40] sm:$0xff] %v981
                  %v983 = vld [vmem:[%s971 + $0x28] sm:$0xff]
                  %984 = vst [vmem:[%s972 + $0x48] sm:$0xff] %v983
                  %v985 = vld [vmem:[%s971 + $0x30] sm:$0xff]
                  %986 = vst [vmem:[%s972 + $0x60] sm:$0xff] %v985
                  %v987 = vld [vmem:[%s971 + $0x38] sm:$0xff]
                  %988 = vst [vmem:[%s972 + $0x68] sm:$0xff] %v987
                  %v989 = vld [vmem:[%s971 + $0x40] sm:$0xff]
                  %990 = vst [vmem:[%s972 + $0x80] sm:$0xff] %v989
                  %v991 = vld [vmem:[%s971 + $0x48] sm:$0xff]
                  %992 = vst [vmem:[%s972 + $0x88] sm:$0xff] %v991
                $region96: #{_forward.1} parent=90 // loop_footer
                  %s970 = sadd.s32 1, %s966
                $region97: #{_forward.1} parent=90 // loop_footer_branch
                  %965 = sbr.rel target = $region93
                $region98: #{_forward.1} parent=90 // loop_exit
                  _
              $region91: #{_forward.1} parent=75 // pred_fallthru
                _
              // Predicated region
              $region99: #{_forward.1} parent=75 // pred_check
                _
              $region100: #{_forward.1} parent=75 // pred_check_branch
                %994 = sbr.rel target = $region102
              $region101: #{_forward.1} parent=75 // pred_region
                _
              $region102: #{_forward.1} parent=75 // pred_fallthru
                _
            $region76: #{_forward.1} parent=71 // pred_fallthru
              _
            // Predicated region
            $region77: #{_forward.1} parent=71 // pred_check
              _
            $region78: #{_forward.1} parent=71 // pred_check_branch
              %932 = sbr.rel target = $region80
            $region79: #{_forward.1} parent=71 // pred_region
              %s934 = ssub.s32 256, 1
              loop: start=0, step=1, limit=1
              $region81: #{_forward.1} parent=79 // loop_pre_header
                _
              $region82: #{_forward.1} parent=79 // loop_header
                %s936 = sphi 0, %s940
                %p937 = scmp.ge.s32.totalorder %s936, 1
                %s941 = sphi %s920, %s920
                %s942 = sphi %s926, %s926
              $region83: #{_forward.1} parent=79 // loop_header_branch
                %939 = sbr.rel (%p937) target = $region87
              $region84: #{_forward.1} parent=79 // loop_body
                %v943 = vld [vmem:[%s941] sm:%s934]
                %944 = vst [vmem:[%s942] sm:%s934] %v943
                %v945 = vld [vmem:[%s941 + $0x8] sm:%s934]
                %946 = vst [vmem:[%s942 + $0x8] sm:%s934] %v945
                %v947 = vld [vmem:[%s941 + $0x10] sm:%s934]
                %948 = vst [vmem:[%s942 + $0x20] sm:%s934] %v947
                %v949 = vld [vmem:[%s941 + $0x18] sm:%s934]
                %950 = vst [vmem:[%s942 + $0x28] sm:%s934] %v949
                %v951 = vld [vmem:[%s941 + $0x20] sm:%s934]
                %952 = vst [vmem:[%s942 + $0x40] sm:%s934] %v951
                %v953 = vld [vmem:[%s941 + $0x28] sm:%s934]
                %954 = vst [vmem:[%s942 + $0x48] sm:%s934] %v953
                %v955 = vld [vmem:[%s941 + $0x30] sm:%s934]
                %956 = vst [vmem:[%s942 + $0x60] sm:%s934] %v955
                %v957 = vld [vmem:[%s941 + $0x38] sm:%s934]
                %958 = vst [vmem:[%s942 + $0x68] sm:%s934] %v957
                %v959 = vld [vmem:[%s941 + $0x40] sm:%s934]
                %960 = vst [vmem:[%s942 + $0x80] sm:%s934] %v959
                %v961 = vld [vmem:[%s941 + $0x48] sm:%s934]
                %962 = vst [vmem:[%s942 + $0x88] sm:%s934] %v961
              $region85: #{_forward.1} parent=79 // loop_footer
                %s940 = sadd.s32 1, %s936
              $region86: #{_forward.1} parent=79 // loop_footer_branch
                %935 = sbr.rel target = $region82
              $region87: #{_forward.1} parent=79 // loop_exit
                _
            $region80: #{_forward.1} parent=71 // pred_fallthru
              _
          $region72: #{_forward.1} parent=67 // pred_fallthru
            _
          %995 = vnop
        $region68: #{_forward.1} parent=63 // pred_fallthru
          _
      $region64: #{_forward.1} parent=5 // pred_fallthru
        _
      %p996 = scmp.le.s32.totalorder 2, %s17
      // Predicated region
      $region103: #{_forward.1} parent=5 // pred_check
        %p997 = pneg %p996
      $region104: #{_forward.1} parent=5 // pred_check_branch
        %999 = sbr.rel (%p997) target = $region106
      $region105: #{_forward.1} parent=5 // pred_region
        %s1000 = ssub.s32 %s17, 2
        // Predicated region
        $region107: #{_forward.1} parent=105 // pred_check
          %p1001 = pneg %p317
        $region108: #{_forward.1} parent=105 // pred_check_branch
          %1003 = sbr.rel (%p1001) target = $region110
        $region109: #{_forward.1} parent=105 // pred_region
          %s1004 = sand.u32 %s302, 1
          %s1005 = sand.u32 %s302, 1
          %s1006 = smul.addr %s1005, 80
          %s1007 = scalar_lea.vmem [#allocation2], %s1006
        $region110: #{_forward.1} parent=105 // pred_fallthru
          _
      $region106: #{_forward.1} parent=5 // pred_fallthru
        _
    $region6: #{_forward.1} parent=1 // loop_footer
      %s21 = sadd.s32 1, %s17
    $region7: #{_forward.1} parent=1 // loop_footer_branch
      %16 = sbr.rel target = $region3
    $region8: #{_forward.1} parent=1 // loop_exit
      _

</llo_original>
